<compile_context>
chip_gen: v5e
topology: v5e:2x2
jax: 0.10.0
libtpu: 0.0.40
codegen_flags: <defaults>
</compile_context>

<pallas_src>
import functools
import math

import jax
import jax.numpy as jnp
import numpy as np
from jax.experimental import pallas as pl
from jax.experimental.pallas import tpu as pltpu

# Small compat shim (current name is pltpu.CompilerParams).
_CompilerParams = getattr(pltpu, "CompilerParams", None)
if _CompilerParams is None:  # pragma: no cover - older jax naming
    _CompilerParams = getattr(pltpu, "TPUCompilerParams")

LOGIT_PAD = 128                    # lane-dense classifier-head width (sliced back to 4)
VMEM_LIMIT = 32 * 1024 * 1024      # <= physical VMEM on v5e/v6e (128 MiB) and v7x (64 MiB)


# ---------------------------------------------------------------------------
# Helpers
# ---------------------------------------------------------------------------
def _pick_tile(dim, target, align):
    """Largest multiple of `align` that divides `dim` and is <= target, else dim."""
    if dim <= target:
        return dim
    t = (target // align) * align
    while t >= align:
        if dim % t == 0:
            return t
        t -= align
    return dim


# ---------------------------------------------------------------------------
# Kernel 1: tiled matmul + bias (+ optional fused relu / residual+LayerNorm),
# f32 VMEM accumulator, contraction axis last ("arbitrary").
# ---------------------------------------------------------------------------
def _matmul_kernel(x_ref, w_ref, b_ref, *rest, activation, fuse_ln, eps):
    if fuse_ln:
        res_ref, g_ref, beta_ref, o_ref, acc_ref = rest
    else:
        o_ref, acc_ref = rest

    k = pl.program_id(2)

    @pl.when(k == 0)
    def _():
        acc_ref[...] = jnp.zeros_like(acc_ref)

    acc_ref[...] += jnp.dot(x_ref[...], w_ref[...],
                            preferred_element_type=jnp.float32)

    @pl.when(k == pl.num_programs(2) - 1)
    def _():
        y = acc_ref[...] + b_ref[...].astype(jnp.float32)
        if activation == "relu":
            y = jnp.maximum(y, 0.0)
        if fuse_ln:
            # Fused residual add + LayerNorm epilogue (requires tn == full N).
            y = y + res_ref[...].astype(jnp.float32)
            mu = jnp.mean(y, axis=-1, keepdims=True)
            yc = y - mu
            var = jnp.mean(yc * yc, axis=-1, keepdims=True)
            y = yc * jax.lax.rsqrt(var + eps)          # rsqrt on the EUP
            y = (y * g_ref[...].astype(jnp.float32)
                 + beta_ref[...].astype(jnp.float32))
        o_ref[...] = y.astype(o_ref.dtype)


def matmul_bias(x, w, b, *, residual=None, gamma=None, beta=None,
                activation=None, out_dtype=None, eps=1e-5):
    """y = [LN(residual + )] activation(x @ w + b);  x:(M,K), w:(K,N), b:(N,)."""
    M, K = x.shape
    K2, N = w.shape
    assert K == K2
    fuse_ln = residual is not None
    out_dtype = out_dtype if out_dtype is not None else x.dtype

    tm = _pick_tile(M, 512, 16)                   # 16-aligned rows for bf16 sublanes
    tn = N if fuse_ln else _pick_tile(N, 512, 128)  # LN needs the full feature row
    tk = K if K <= 1024 else _pick_tile(K, 1024, 128)

    in_specs = [
        pl.BlockSpec((tm, tk), lambda i, j, k: (i, k)),
        pl.BlockSpec((tk, tn), lambda i, j, k: (k, j)),
        pl.BlockSpec((1, tn), lambda i, j, k: (0, j)),
    ]
    operands = [x, w, b.reshape(1, N)]
    if fuse_ln:
        in_specs += [
            pl.BlockSpec((tm, tn), lambda i, j, k: (i, j)),
            pl.BlockSpec((1, tn), lambda i, j, k: (0, j)),
            pl.BlockSpec((1, tn), lambda i, j, k: (0, j)),
        ]
        operands += [residual, gamma.reshape(1, N), beta.reshape(1, N)]

    cost = pl.CostEstimate(
        flops=int(2 * M * N * K),
        transcendentals=0,
        bytes_accessed=int(M * K * x.dtype.itemsize + K * N * w.dtype.itemsize
                           + M * N * jnp.dtype(out_dtype).itemsize),
    )

    return pl.pallas_call(
        functools.partial(_matmul_kernel, activation=activation,
                          fuse_ln=fuse_ln, eps=eps),
        out_shape=jax.ShapeDtypeStruct((M, N), out_dtype),
        grid=(M // tm, N // tn, K // tk),
        in_specs=in_specs,
        out_specs=pl.BlockSpec((tm, tn), lambda i, j, k: (i, j)),
        scratch_shapes=[pltpu.VMEM((tm, tn), jnp.float32)],
        compiler_params=_CompilerParams(
            dimension_semantics=("parallel", "parallel", "arbitrary"),
            vmem_limit_bytes=VMEM_LIMIT),
        cost_estimate=cost,
    )(*operands)


# ---------------------------------------------------------------------------
# Kernel 2: multi-head self-attention straight off the fused (B*S, 3D) QKV slab.
# Grid over batches; per-head loop keeps the f32 score block at (S, S).
# ---------------------------------------------------------------------------
def _attention_kernel(bias_ref, qkv_ref, o_ref, *, H, Dh):
    D = H * Dh
    bias = bias_ref[0]                                 # (1, S) additive key-pad bias
    out_heads = []
    for h in range(H):                                 # static unroll over heads
        q = qkv_ref[:, h * Dh:(h + 1) * Dh]            # (S, Dh) bf16 (Q pre-scaled)
        k = qkv_ref[:, D + h * Dh:D + (h + 1) * Dh]    # (S, Dh) bf16
        v = qkv_ref[:, 2 * D + h * Dh:2 * D + (h + 1) * Dh]
        # bf16 inputs, f32 accumulation on the MXU; contract on Dh (no K transpose).
        s = jax.lax.dot_general(
            q, k, dimension_numbers=(((1,), (1,)), ((), ())),
            preferred_element_type=jnp.float32)        # (S, S) f32
        s = s + bias
        m = jnp.max(s, axis=-1, keepdims=True)
        p = jnp.exp(s - m)
        denom = jnp.sum(p, axis=-1, keepdims=True)
        p = p * pl.reciprocal(denom, approx=True)      # EUP reciprocal
        ctx = jnp.dot(p.astype(qkv_ref.dtype), v,
                      preferred_element_type=jnp.float32)
        out_heads.append(ctx.astype(o_ref.dtype))
    o_ref[...] = jnp.concatenate(out_heads, axis=-1)   # one lane-dense (S, D) store


def multi_head_attention(qkv, bias, *, B, S, H, Dh):
    """qkv: (B*S, 3D) bf16 batch-major; bias: (B, 1, S) f32 additive key-pad bias."""
    D = H * Dh
    cost = pl.CostEstimate(
        flops=int(4 * B * H * S * S * Dh),
        transcendentals=int(B * H * S * S),
        bytes_accessed=int(qkv.size * qkv.dtype.itemsize
                           + B * S * D * qkv.dtype.itemsize + bias.size * 4),
    )
    return pl.pallas_call(
        functools.partial(_attention_kernel, H=H, Dh=Dh),
        out_shape=jax.ShapeDtypeStruct((B * S, D), qkv.dtype),
        grid=(B,),
        in_specs=[
            pl.BlockSpec((1, 1, S), lambda b: (b, 0, 0)),
            pl.BlockSpec((S, 3 * D), lambda b: (b, 0)),
        ],
        out_specs=pl.BlockSpec((S, D), lambda b: (b, 0)),
        compiler_params=_CompilerParams(
            dimension_semantics=("parallel",),
            vmem_limit_bytes=VMEM_LIMIT),
        cost_estimate=cost,
    )(bias, qkv)


# ---------------------------------------------------------------------------
# Model glue (embedding gather, parameters) -- pure JAX.
# ---------------------------------------------------------------------------
def sinusoidal_positional_encoding(max_len, d_model):
    pos = np.arange(max_len)[:, None].astype(np.float32)
    div = np.exp(np.arange(0, d_model, 2).astype(np.float32)
                 * (-math.log(10000.0) / d_model))
    pe = np.zeros((max_len, d_model), dtype=np.float32)
    pe[:, 0::2] = np.sin(pos * div)
    pe[:, 1::2] = np.cos(pos * div)
    return jnp.asarray(pe)


def init_params(key, d_vocab, d_model, nhead, d_ff, num_layers):
    keys = jax.random.split(key, 4 + num_layers)

    def dense(k, fan_in, shape):
        return jax.random.normal(k, shape, jnp.float32) / math.sqrt(fan_in)

    params = {
        "embedding": jax.random.normal(keys[0], (d_vocab, d_model), jnp.float32)
        / math.sqrt(d_model),
        "fc_w": dense(keys[1], d_model, (d_model, 4)),
        "fc_b": 0.02 * jax.random.normal(keys[2], (4,), jnp.float32),
        "layers": [],
    }
    for li in range(num_layers):
        lk = jax.random.split(keys[4 + li], 8)
        params["layers"].append({
            "w_qkv": dense(lk[0], d_model, (d_model, 3 * d_model)),
            "b_qkv": 0.02 * jax.random.normal(lk[4], (3 * d_model,), jnp.float32),
            "w_o": dense(lk[1], d_model, (d_model, d_model)),
            "b_o": 0.02 * jax.random.normal(lk[5], (d_model,), jnp.float32),
            "ln1_g": jnp.ones((d_model,), jnp.float32),
            "ln1_b": jnp.zeros((d_model,), jnp.float32),
            "w1": dense(lk[2], d_model, (d_model, d_ff)),
            "b1": 0.02 * jax.random.normal(lk[6], (d_ff,), jnp.float32),
            "w2": dense(lk[3], d_ff, (d_ff, d_model)),
            "b2": 0.02 * jax.random.normal(lk[7], (d_model,), jnp.float32),
            "ln2_g": jnp.ones((d_model,), jnp.float32),
            "ln2_b": jnp.zeros((d_model,), jnp.float32),
        })
    return params


def prepare_inference_params(params, *, nhead):
    """One-time weight prep: bf16 cast, fold 1/sqrt(Dh) into Q projection,
    zero-pad the classifier head to 128 lanes. Hoisted out of the forward."""
    D = params["embedding"].shape[1]
    Dh = D // nhead
    scale = 1.0 / math.sqrt(Dh)

    prep = {"embedding": params["embedding"], "layers": []}
    for layer in params["layers"]:
        w_qkv = layer["w_qkv"].at[:, :D].multiply(scale)   # fold softmax scale into Q
        b_qkv = layer["b_qkv"].at[:D].multiply(scale)
        prep["layers"].append({
            "w_qkv": w_qkv.astype(jnp.bfloat16), "b_qkv": b_qkv,
            "w_o": layer["w_o"].astype(jnp.bfloat16), "b_o": layer["b_o"],
            "ln1_g": layer["ln1_g"], "ln1_b": layer["ln1_b"],
            "w1": layer["w1"].astype(jnp.bfloat16), "b1": layer["b1"],
            "w2": layer["w2"].astype(jnp.bfloat16), "b2": layer["b2"],
            "ln2_g": layer["ln2_g"], "ln2_b": layer["ln2_b"],
        })
    fc_w = jnp.zeros((D, LOGIT_PAD), jnp.float32).at[:, :4].set(params["fc_w"])
    fc_b = jnp.zeros((LOGIT_PAD,), jnp.float32).at[:4].set(params["fc_b"])
    prep["fc_w"] = fc_w.astype(jnp.bfloat16)
    prep["fc_b"] = fc_b
    return prep


def kipisi_forward(prep, tokens, *, nhead):
    """tokens: int32 (S, B) seq-first (matches the PyTorch non-batch-first layout)."""
    S, B = tokens.shape
    D = prep["embedding"].shape[1]
    H = nhead
    Dh = D // H

    # TODO(synk): token-embedding gather + sinusoidal PE stay in XLA (tiny, no clean
    # Pallas win at this size); dropout layers are identity in eval mode.
    emb = jnp.take(prep["embedding"], tokens.T, axis=0)                # (B, S, D)
    pe = sinusoidal_positional_encoding(S, D)                          # (S, D)
    x = (emb * math.sqrt(D) + pe[None, :, :]).reshape(B * S, D)
    x = x.astype(jnp.bfloat16)                                         # row = b*S + s

    # Additive key-padding bias (tiny; replaces a (B, S, S) boolean mask).
    key_pad = (tokens == 0).T                                          # (B, S)
    bias = jnp.where(key_pad, -1e9, 0.0).astype(jnp.float32).reshape(B, 1, S)

    for layer in prep["layers"]:
        # Fused QKV projection (Q columns pre-scaled by 1/sqrt(Dh)).
        qkv = matmul_bias(x, layer["w_qkv"], layer["b_qkv"],
                          out_dtype=jnp.bfloat16)                      # (B*S, 3D)
        # Attention reads qkv directly (no split / head transposes in HBM).
        ctx = multi_head_attention(qkv, bias, B=B, S=S, H=H, Dh=Dh)    # (B*S, D)
        # W_o projection with fused residual-add + LayerNorm epilogue.
        x = matmul_bias(ctx, layer["w_o"], layer["b_o"],
                        residual=x, gamma=layer["ln1_g"], beta=layer["ln1_b"],
                        out_dtype=jnp.bfloat16)
        # FFN: relu fused in matmul 1, residual+LN fused in matmul 2.
        h1 = matmul_bias(x, layer["w1"], layer["b1"], activation="relu",
                         out_dtype=jnp.bfloat16)
        x = matmul_bias(h1, layer["w2"], layer["b2"],
                        residual=x, gamma=layer["ln2_g"], beta=layer["ln2_b"],
                        out_dtype=jnp.bfloat16)

    # Classifier head: N padded 4 -> 128 so the output store is lane-dense.
    logits_pad = matmul_bias(x, prep["fc_w"], prep["fc_b"],
                             out_dtype=jnp.float32)                    # (B*S, 128)
    return logits_pad[:, :4].reshape(B, S, 4).transpose(1, 0, 2)       # (S, B, 4)


# ---------------------------------------------------------------------------
# Pure-JAX f32 reference (same math, no Pallas) for a loose numerical check.
# ---------------------------------------------------------------------------
def reference_forward(params, tokens, *, nhead):
    S, B = tokens.shape
    D = params["embedding"].shape[1]
    H = nhead
    Dh = D // H
    scale = 1.0 / math.sqrt(Dh)

    emb = jnp.take(params["embedding"], tokens, axis=0)
    pe = sinusoidal_positional_encoding(S, D)
    x = (emb * math.sqrt(D) + pe[:, None, :]).reshape(S * B, D)

    key_pad = (tokens == 0).T
    bias = jnp.where(key_pad, -1e9, 0.0)

    def layernorm(v, g, b, eps=1e-5):
        mu = v.mean(-1, keepdims=True)
        var = ((v - mu) ** 2).mean(-1, keepdims=True)
        return (v - mu) / jnp.sqrt(var + eps) * g + b

    for layer in params["layers"]:
        qkv = x @ layer["w_qkv"] + layer["b_qkv"]
        q, k, v = jnp.split(qkv, 3, axis=1)

        def to_heads(t):
            return t.reshape(S, B, H, Dh).transpose(1, 2, 0, 3)          # (B,H,S,Dh)

        qh, kh, vh = to_heads(q), to_heads(k), to_heads(v)
        s = jnp.einsum("bhqd,bhkd->bhqk", qh, kh) * scale
        s = s + bias[:, None, None, :]
        p = jax.nn.softmax(s, axis=-1)
        ctx = jnp.einsum("bhqk,bhkd->bhqd", p, vh)
        ctx = ctx.transpose(2, 0, 1, 3).reshape(S * B, D)
        attn_out = ctx @ layer["w_o"] + layer["b_o"]
        x = layernorm(x + attn_out, layer["ln1_g"], layer["ln1_b"])
        h = jnp.maximum(x @ layer["w1"] + layer["b1"], 0.0)
        h = h @ layer["w2"] + layer["b2"]
        x = layernorm(x + h, layer["ln2_g"], layer["ln2_b"])

    logits = x @ params["fc_w"] + params["fc_b"]
    return logits.reshape(S, B, 4)


if __name__ == "__main__":
    # Small shapes consistent with the module (d_model divisible by nhead).
    d_vocab, d_model, nhead, d_ff, num_layers = 64, 32, 4, 64, 2
    S, B = 8, 2

    key = jax.random.PRNGKey(0)
    pkey, tkey = jax.random.split(key)
    params = init_params(pkey, d_vocab, d_model, nhead, d_ff, num_layers)
    prep = prepare_inference_params(params, nhead=nhead)

    tokens = jax.random.randint(tkey, (S, B), 0, d_vocab, dtype=jnp.int32)
    tokens = tokens.at[-2:, 0].set(0)  # force some padding positions (token id 0)

    forward = jax.jit(functools.partial(kipisi_forward, nhead=nhead))
    logits = forward(prep, tokens)
    logits = jax.block_until_ready(logits)

    ref = reference_forward(params, tokens, nhead=nhead)
    max_err = float(jnp.max(jnp.abs(logits.astype(jnp.float32) - ref)))

    assert logits.shape == (S, B, 4)
    assert np.isfinite(np.asarray(logits)).all()
    if max_err < 0.35:  # loose bf16-vs-f32 tolerance
        print("KERNEL_OK")
    else:
        print(f"MAX_ABS_ERR={max_err:.4f}")
</pallas_src>

<mosaic_0001>
module attributes {stable_mosaic.version = 11 : i64} {
  func.func @_matmul_kernel(%arg0: i32, %arg1: i32, %arg2: i32, %arg3: memref<16x32xbf16, #tpu.memory_space<vmem>>, %arg4: memref<32x64xbf16, #tpu.memory_space<vmem>>, %arg5: memref<1x64xf32, #tpu.memory_space<vmem>>, %arg6: memref<16x64xbf16, #tpu.memory_space<vmem>>, %arg7: memref<16x64xf32, #tpu.memory_space<vmem>>) attributes {dimension_semantics = [#tpu.dimension_semantics<parallel>, #tpu.dimension_semantics<parallel>, #tpu.dimension_semantics<arbitrary>], iteration_bounds = array<i64: 1, 1, 1>, scalar_prefetch = 0 : i64, scratch_operands = 1 : i64, tpu.core_type = #tpu.core_type<tc>, window_params = [{transform_indices = @transform_0, window_bounds = array<i64: 16, 32>}, {transform_indices = @transform_1, window_bounds = array<i64: 32, 64>}, {transform_indices = @transform_2, window_bounds = array<i64: 1, 64>}, {transform_indices = @transform_3, window_bounds = array<i64: 16, 64>}]} {
    %c0_i32 = arith.constant 0 : i32
    %0 = arith.cmpi eq, %arg2, %c0_i32 : i32
    %1 = arith.extui %0 : i1 to i32
    %c0_i32_0 = arith.constant 0 : i32
    %2 = arith.cmpi ne, %1, %c0_i32_0 : i32
    scf.if %2 {
      %cst_10 = arith.constant 0.000000e+00 : f32
      %12 = vector.broadcast %cst_10 : f32 to vector<16x64xf32>
      %c0_11 = arith.constant 0 : index
      %c0_12 = arith.constant 0 : index
      %13 = vector.load %arg7[%c0_11, %c0_12] : memref<16x64xf32, #tpu.memory_space<vmem>>, vector<16x64xf32>
      tpu.vector_store %arg7[%c0_11, %c0_12], %12 {strides = array<i32>} : memref<16x64xf32, #tpu.memory_space<vmem>>, vector<16x64xf32>,
    } else {
    }
    %c0 = arith.constant 0 : index
    %c0_1 = arith.constant 0 : index
    %3 = vector.load %arg7[%c0, %c0_1] : memref<16x64xf32, #tpu.memory_space<vmem>>, vector<16x64xf32>
    %c0_2 = arith.constant 0 : index
    %c0_3 = arith.constant 0 : index
    %4 = vector.load %arg3[%c0_2, %c0_3] : memref<16x32xbf16, #tpu.memory_space<vmem>>, vector<16x32xbf16>
    %c0_4 = arith.constant 0 : index
    %c0_5 = arith.constant 0 : index
    %5 = vector.load %arg4[%c0_4, %c0_5] : memref<32x64xbf16, #tpu.memory_space<vmem>>, vector<32x64xbf16>
    %cst = arith.constant dense<0.000000e+00> : vector<16x64xf32>
    %6 = tpu.matmul %4, %5, %cst {dimension_numbers = #tpu.dot_dimension_numbers<[1], [0], [0], [1], [0, 0, 1, 1], [], []>} : vector<16x32xbf16>, vector<32x64xbf16>, vector<16x64xf32> -> vector<16x64xf32>
    %7 = arith.addf %3, %6 : vector<16x64xf32>
    %c0_6 = arith.constant 0 : index
    %c0_7 = arith.constant 0 : index
    %8 = vector.load %arg7[%c0_6, %c0_7] : memref<16x64xf32, #tpu.memory_space<vmem>>, vector<16x64xf32>
    tpu.vector_store %arg7[%c0_6, %c0_7], %7 {strides = array<i32>} : memref<16x64xf32, #tpu.memory_space<vmem>>, vector<16x64xf32>,
    %c0_i32_8 = arith.constant 0 : i32
    %9 = arith.cmpi eq, %arg2, %c0_i32_8 : i32
    %10 = arith.extui %9 : i1 to i32
    %c0_i32_9 = arith.constant 0 : i32
    %11 = arith.cmpi ne, %10, %c0_i32_9 : i32
    scf.if %11 {
      %c0_10 = arith.constant 0 : index
      %c0_11 = arith.constant 0 : index
      %12 = vector.load %arg7[%c0_10, %c0_11] : memref<16x64xf32, #tpu.memory_space<vmem>>, vector<16x64xf32>
      %c0_12 = arith.constant 0 : index
      %c0_13 = arith.constant 0 : index
      %13 = vector.load %arg5[%c0_12, %c0_13] : memref<1x64xf32, #tpu.memory_space<vmem>>, vector<1x64xf32>
      %14 = vector.broadcast %13 : vector<1x64xf32> to vector<16x64xf32>
      %15 = arith.addf %12, %14 : vector<16x64xf32>
      %cst_14 = arith.constant 0.000000e+00 : f32
      %16 = vector.broadcast %cst_14 : f32 to vector<16x64xf32>
      %17 = arith.maximumf %15, %16 : vector<16x64xf32>
      %18 = arith.truncf %17 : vector<16x64xf32> to vector<16x64xbf16>
      %c0_15 = arith.constant 0 : index
      %c0_16 = arith.constant 0 : index
      %19 = vector.load %arg6[%c0_15, %c0_16] : memref<16x64xbf16, #tpu.memory_space<vmem>>, vector<16x64xbf16>
      tpu.vector_store %arg6[%c0_15, %c0_16], %18 {strides = array<i32>} : memref<16x64xbf16, #tpu.memory_space<vmem>>, vector<16x64xbf16>,
    } else {
    }
    return
  }
  func.func @transform_0(%arg0: i32, %arg1: i32, %arg2: i32) -> (i32, i32) {
    %c0_i32 = arith.constant 0 : i32
    return %arg0, %arg2 : i32, i32
  }
  func.func @transform_1(%arg0: i32, %arg1: i32, %arg2: i32) -> (i32, i32) {
    %c0_i32 = arith.constant 0 : i32
    return %arg2, %arg1 : i32, i32
  }
  func.func @transform_2(%arg0: i32, %arg1: i32, %arg2: i32) -> (i32, i32) {
    %c0_i32 = arith.constant 0 : i32
    %c0_i32_0 = arith.constant 0 : i32
    return %c0_i32, %arg1 : i32, i32
  }
  func.func @transform_3(%arg0: i32, %arg1: i32, %arg2: i32) -> (i32, i32) {
    %c0_i32 = arith.constant 0 : i32
    return %arg0, %arg1 : i32, i32
  }
}

module attributes {stable_mosaic.version = 11 : i64} {
  func.func @_matmul_kernel(%arg0: i32, %arg1: i32, %arg2: i32, %arg3: memref<16x32xbf16, #tpu.memory_space<vmem>>, %arg4: memref<32x96xbf16, #tpu.memory_space<vmem>>, %arg5: memref<1x96xf32, #tpu.memory_space<vmem>>, %arg6: memref<16x96xbf16, #tpu.memory_space<vmem>>, %arg7: memref<16x96xf32, #tpu.memory_space<vmem>>) attributes {dimension_semantics = [#tpu.dimension_semantics<parallel>, #tpu.dimension_semantics<parallel>, #tpu.dimension_semantics<arbitrary>], iteration_bounds = array<i64: 1, 1, 1>, scalar_prefetch = 0 : i64, scratch_operands = 1 : i64, tpu.core_type = #tpu.core_type<tc>, window_params = [{transform_indices = @transform_0, window_bounds = array<i64: 16, 32>}, {transform_indices = @transform_1, window_bounds = array<i64: 32, 96>}, {transform_indices = @transform_2, window_bounds = array<i64: 1, 96>}, {transform_indices = @transform_3, window_bounds = array<i64: 16, 96>}]} {
    %c0_i32 = arith.constant 0 : i32
    %0 = arith.cmpi eq, %arg2, %c0_i32 : i32
    %1 = arith.extui %0 : i1 to i32
    %c0_i32_0 = arith.constant 0 : i32
    %2 = arith.cmpi ne, %1, %c0_i32_0 : i32
    scf.if %2 {
      %cst_10 = arith.constant 0.000000e+00 : f32
      %12 = vector.broadcast %cst_10 : f32 to vector<16x96xf32>
      %c0_11 = arith.constant 0 : index
      %c0_12 = arith.constant 0 : index
      %13 = vector.load %arg7[%c0_11, %c0_12] : memref<16x96xf32, #tpu.memory_space<vmem>>, vector<16x96xf32>
      tpu.vector_store %arg7[%c0_11, %c0_12], %12 {strides = array<i32>} : memref<16x96xf32, #tpu.memory_space<vmem>>, vector<16x96xf32>,
    } else {
    }
    %c0 = arith.constant 0 : index
    %c0_1 = arith.constant 0 : index
    %3 = vector.load %arg7[%c0, %c0_1] : memref<16x96xf32, #tpu.memory_space<vmem>>, vector<16x96xf32>
    %c0_2 = arith.constant 0 : index
    %c0_3 = arith.constant 0 : index
    %4 = vector.load %arg3[%c0_2, %c0_3] : memref<16x32xbf16, #tpu.memory_space<vmem>>, vector<16x32xbf16>
    %c0_4 = arith.constant 0 : index
    %c0_5 = arith.constant 0 : index
    %5 = vector.load %arg4[%c0_4, %c0_5] : memref<32x96xbf16, #tpu.memory_space<vmem>>, vector<32x96xbf16>
    %cst = arith.constant dense<0.000000e+00> : vector<16x96xf32>
    %6 = tpu.matmul %4, %5, %cst {dimension_numbers = #tpu.dot_dimension_numbers<[1], [0], [0], [1], [0, 0, 1, 1], [], []>} : vector<16x32xbf16>, vector<32x96xbf16>, vector<16x96xf32> -> vector<16x96xf32>
    %7 = arith.addf %3, %6 : vector<16x96xf32>
    %c0_6 = arith.constant 0 : index
    %c0_7 = arith.constant 0 : index
    %8 = vector.load %arg7[%c0_6, %c0_7] : memref<16x96xf32, #tpu.memory_space<vmem>>, vector<16x96xf32>
    tpu.vector_store %arg7[%c0_6, %c0_7], %7 {strides = array<i32>} : memref<16x96xf32, #tpu.memory_space<vmem>>, vector<16x96xf32>,
    %c0_i32_8 = arith.constant 0 : i32
    %9 = arith.cmpi eq, %arg2, %c0_i32_8 : i32
    %10 = arith.extui %9 : i1 to i32
    %c0_i32_9 = arith.constant 0 : i32
    %11 = arith.cmpi ne, %10, %c0_i32_9 : i32
    scf.if %11 {
      %c0_10 = arith.constant 0 : index
      %c0_11 = arith.constant 0 : index
      %12 = vector.load %arg7[%c0_10, %c0_11] : memref<16x96xf32, #tpu.memory_space<vmem>>, vector<16x96xf32>
      %c0_12 = arith.constant 0 : index
      %c0_13 = arith.constant 0 : index
      %13 = vector.load %arg5[%c0_12, %c0_13] : memref<1x96xf32, #tpu.memory_space<vmem>>, vector<1x96xf32>
      %14 = vector.broadcast %13 : vector<1x96xf32> to vector<16x96xf32>
      %15 = arith.addf %12, %14 : vector<16x96xf32>
      %16 = arith.truncf %15 : vector<16x96xf32> to vector<16x96xbf16>
      %c0_14 = arith.constant 0 : index
      %c0_15 = arith.constant 0 : index
      %17 = vector.load %arg6[%c0_14, %c0_15] : memref<16x96xbf16, #tpu.memory_space<vmem>>, vector<16x96xbf16>
      tpu.vector_store %arg6[%c0_14, %c0_15], %16 {strides = array<i32>} : memref<16x96xbf16, #tpu.memory_space<vmem>>, vector<16x96xbf16>,
    } else {
    }
    return
  }
  func.func @transform_0(%arg0: i32, %arg1: i32, %arg2: i32) -> (i32, i32) {
    %c0_i32 = arith.constant 0 : i32
    return %arg0, %arg2 : i32, i32
  }
  func.func @transform_1(%arg0: i32, %arg1: i32, %arg2: i32) -> (i32, i32) {
    %c0_i32 = arith.constant 0 : i32
    return %arg2, %arg1 : i32, i32
  }
  func.func @transform_2(%arg0: i32, %arg1: i32, %arg2: i32) -> (i32, i32) {
    %c0_i32 = arith.constant 0 : i32
    %c0_i32_0 = arith.constant 0 : i32
    return %c0_i32, %arg1 : i32, i32
  }
  func.func @transform_3(%arg0: i32, %arg1: i32, %arg2: i32) -> (i32, i32) {
    %c0_i32 = arith.constant 0 : i32
    return %arg0, %arg1 : i32, i32
  }
}

module attributes {stable_mosaic.version = 11 : i64} {
  func.func @_matmul_kernel(%arg0: i32, %arg1: i32, %arg2: i32, %arg3: memref<16x32xbf16, #tpu.memory_space<vmem>>, %arg4: memref<32x32xbf16, #tpu.memory_space<vmem>>, %arg5: memref<1x32xf32, #tpu.memory_space<vmem>>, %arg6: memref<16x32xbf16, #tpu.memory_space<vmem>>, %arg7: memref<1x32xf32, #tpu.memory_space<vmem>>, %arg8: memref<1x32xf32, #tpu.memory_space<vmem>>, %arg9: memref<16x32xbf16, #tpu.memory_space<vmem>>, %arg10: memref<16x32xf32, #tpu.memory_space<vmem>>) attributes {dimension_semantics = [#tpu.dimension_semantics<parallel>, #tpu.dimension_semantics<parallel>, #tpu.dimension_semantics<arbitrary>], iteration_bounds = array<i64: 1, 1, 1>, scalar_prefetch = 0 : i64, scratch_operands = 1 : i64, tpu.core_type = #tpu.core_type<tc>, window_params = [{transform_indices = @transform_0, window_bounds = array<i64: 16, 32>}, {transform_indices = @transform_1, window_bounds = array<i64: 32, 32>}, {transform_indices = @transform_2, window_bounds = array<i64: 1, 32>}, {transform_indices = @transform_3, window_bounds = array<i64: 16, 32>}, {transform_indices = @transform_4, window_bounds = array<i64: 1, 32>}, {transform_indices = @transform_5, window_bounds = array<i64: 1, 32>}, {transform_indices = @transform_6, window_bounds = array<i64: 16, 32>}]} {
    %c0_i32 = arith.constant 0 : i32
    %0 = arith.cmpi eq, %arg2, %c0_i32 : i32
    %1 = arith.extui %0 : i1 to i32
    %c0_i32_0 = arith.constant 0 : i32
    %2 = arith.cmpi ne, %1, %c0_i32_0 : i32
    scf.if %2 {
      %cst_10 = arith.constant 0.000000e+00 : f32
      %12 = vector.broadcast %cst_10 : f32 to vector<16x32xf32>
      %c0_11 = arith.constant 0 : index
      %c0_12 = arith.constant 0 : index
      %13 = vector.load %arg10[%c0_11, %c0_12] : memref<16x32xf32, #tpu.memory_space<vmem>>, vector<16x32xf32>
      tpu.vector_store %arg10[%c0_11, %c0_12], %12 {strides = array<i32>} : memref<16x32xf32, #tpu.memory_space<vmem>>, vector<16x32xf32>,
    } else {
    }
    %c0 = arith.constant 0 : index
    %c0_1 = arith.constant 0 : index
    %3 = vector.load %arg10[%c0, %c0_1] : memref<16x32xf32, #tpu.memory_space<vmem>>, vector<16x32xf32>
    %c0_2 = arith.constant 0 : index
    %c0_3 = arith.constant 0 : index
    %4 = vector.load %arg3[%c0_2, %c0_3] : memref<16x32xbf16, #tpu.memory_space<vmem>>, vector<16x32xbf16>
    %c0_4 = arith.constant 0 : index
    %c0_5 = arith.constant 0 : index
    %5 = vector.load %arg4[%c0_4, %c0_5] : memref<32x32xbf16, #tpu.memory_space<vmem>>, vector<32x32xbf16>
    %cst = arith.constant dense<0.000000e+00> : vector<16x32xf32>
    %6 = tpu.matmul %4, %5, %cst {dimension_numbers = #tpu.dot_dimension_numbers<[1], [0], [0], [1], [0, 0, 1, 1], [], []>} : vector<16x32xbf16>, vector<32x32xbf16>, vector<16x32xf32> -> vector<16x32xf32>
    %7 = arith.addf %3, %6 : vector<16x32xf32>
    %c0_6 = arith.constant 0 : index
    %c0_7 = arith.constant 0 : index
    %8 = vector.load %arg10[%c0_6, %c0_7] : memref<16x32xf32, #tpu.memory_space<vmem>>, vector<16x32xf32>
    tpu.vector_store %arg10[%c0_6, %c0_7], %7 {strides = array<i32>} : memref<16x32xf32, #tpu.memory_space<vmem>>, vector<16x32xf32>,
    %c0_i32_8 = arith.constant 0 : i32
    %9 = arith.cmpi eq, %arg2, %c0_i32_8 : i32
    %10 = arith.extui %9 : i1 to i32
    %c0_i32_9 = arith.constant 0 : i32
    %11 = arith.cmpi ne, %10, %c0_i32_9 : i32
    scf.if %11 {
      %c0_10 = arith.constant 0 : index
      %c0_11 = arith.constant 0 : index
      %12 = vector.load %arg10[%c0_10, %c0_11] : memref<16x32xf32, #tpu.memory_space<vmem>>, vector<16x32xf32>
      %c0_12 = arith.constant 0 : index
      %c0_13 = arith.constant 0 : index
      %13 = vector.load %arg5[%c0_12, %c0_13] : memref<1x32xf32, #tpu.memory_space<vmem>>, vector<1x32xf32>
      %14 = vector.broadcast %13 : vector<1x32xf32> to vector<16x32xf32>
      %15 = arith.addf %12, %14 : vector<16x32xf32>
      %c0_14 = arith.constant 0 : index
      %c0_15 = arith.constant 0 : index
      %16 = vector.load %arg6[%c0_14, %c0_15] : memref<16x32xbf16, #tpu.memory_space<vmem>>, vector<16x32xbf16>
      %17 = arith.extf %16 : vector<16x32xbf16> to vector<16x32xf32>
      %18 = arith.addf %15, %17 : vector<16x32xf32>
      %cst_16 = arith.constant dense<0.000000e+00> : vector<16xf32>
      %19 = vector.multi_reduction <add>, %18, %cst_16 [1] : vector<16x32xf32> to vector<16xf32>
      %20 = vector.shape_cast %19 : vector<16xf32> to vector<16x1xf32>
      %cst_17 = arith.constant 3.200000e+01 : f32
      %21 = vector.broadcast %cst_17 : f32 to vector<16x1xf32>
      %22 = arith.divf %20, %21 : vector<16x1xf32>
      %23 = vector.broadcast %22 : vector<16x1xf32> to vector<16x32xf32>
      %24 = arith.subf %18, %23 : vector<16x32xf32>
      %25 = arith.mulf %24, %24 : vector<16x32xf32>
      %cst_18 = arith.constant dense<0.000000e+00> : vector<16xf32>
      %26 = vector.multi_reduction <add>, %25, %cst_18 [1] : vector<16x32xf32> to vector<16xf32>
      %27 = vector.shape_cast %26 : vector<16xf32> to vector<16x1xf32>
      %cst_19 = arith.constant 3.200000e+01 : f32
      %28 = vector.broadcast %cst_19 : f32 to vector<16x1xf32>
      %29 = arith.divf %27, %28 : vector<16x1xf32>
      %cst_20 = arith.constant 9.99999974E-6 : f32
      %30 = vector.broadcast %cst_20 : f32 to vector<16x1xf32>
      %31 = arith.addf %29, %30 : vector<16x1xf32>
      %32 = math.rsqrt %31 : vector<16x1xf32>
      %33 = vector.broadcast %32 : vector<16x1xf32> to vector<16x32xf32>
      %34 = arith.mulf %24, %33 : vector<16x32xf32>
      %c0_21 = arith.constant 0 : index
      %c0_22 = arith.constant 0 : index
      %35 = vector.load %arg7[%c0_21, %c0_22] : memref<1x32xf32, #tpu.memory_space<vmem>>, vector<1x32xf32>
      %36 = vector.broadcast %35 : vector<1x32xf32> to vector<16x32xf32>
      %37 = arith.mulf %34, %36 : vector<16x32xf32>
      %c0_23 = arith.constant 0 : index
      %c0_24 = arith.constant 0 : index
      %38 = vector.load %arg8[%c0_23, %c0_24] : memref<1x32xf32, #tpu.memory_space<vmem>>, vector<1x32xf32>
      %39 = vector.broadcast %38 : vector<1x32xf32> to vector<16x32xf32>
      %40 = arith.addf %37, %39 : vector<16x32xf32>
      %41 = arith.truncf %40 : vector<16x32xf32> to vector<16x32xbf16>
      %c0_25 = arith.constant 0 : index
      %c0_26 = arith.constant 0 : index
      %42 = vector.load %arg9[%c0_25, %c0_26] : memref<16x32xbf16, #tpu.memory_space<vmem>>, vector<16x32xbf16>
      tpu.vector_store %arg9[%c0_25, %c0_26], %41 {strides = array<i32>} : memref<16x32xbf16, #tpu.memory_space<vmem>>, vector<16x32xbf16>,
    } else {
    }
    return
  }
  func.func @transform_0(%arg0: i32, %arg1: i32, %arg2: i32) -> (i32, i32) {
    %c0_i32 = arith.constant 0 : i32
    return %arg0, %arg2 : i32, i32
  }
  func.func @transform_1(%arg0: i32, %arg1: i32, %arg2: i32) -> (i32, i32) {
    %c0_i32 = arith.constant 0 : i32
    return %arg2, %arg1 : i32, i32
  }
  func.func @transform_2(%arg0: i32, %arg1: i32, %arg2: i32) -> (i32, i32) {
    %c0_i32 = arith.constant 0 : i32
    %c0_i32_0 = arith.constant 0 : i32
    return %c0_i32, %arg1 : i32, i32
  }
  func.func @transform_3(%arg0: i32, %arg1: i32, %arg2: i32) -> (i32, i32) {
    %c0_i32 = arith.constant 0 : i32
    return %arg0, %arg1 : i32, i32
  }
  func.func @transform_4(%arg0: i32, %arg1: i32, %arg2: i32) -> (i32, i32) {
    %c0_i32 = arith.constant 0 : i32
    %c0_i32_0 = arith.constant 0 : i32
    return %c0_i32, %arg1 : i32, i32
  }
  func.func @transform_5(%arg0: i32, %arg1: i32, %arg2: i32) -> (i32, i32) {
    %c0_i32 = arith.constant 0 : i32
    %c0_i32_0 = arith.constant 0 : i32
    return %c0_i32, %arg1 : i32, i32
  }
  func.func @transform_6(%arg0: i32, %arg1: i32, %arg2: i32) -> (i32, i32) {
    %c0_i32 = arith.constant 0 : i32
    return %arg0, %arg1 : i32, i32
  }
}

module attributes {stable_mosaic.version = 11 : i64} {
  func.func @_attention_kernel(%arg0: i32, %arg1: memref<1x1x8xf32, #tpu.memory_space<vmem>>, %arg2: memref<8x96xbf16, #tpu.memory_space<vmem>>, %arg3: memref<8x32xbf16, #tpu.memory_space<vmem>>) attributes {dimension_semantics = [#tpu.dimension_semantics<parallel>], iteration_bounds = array<i64: 2>, scalar_prefetch = 0 : i64, scratch_operands = 0 : i64, tpu.core_type = #tpu.core_type<tc>, window_params = [{transform_indices = @transform_0, window_bounds = array<i64: 1, 1, 8>}, {transform_indices = @transform_1, window_bounds = array<i64: 8, 96>}, {transform_indices = @transform_2, window_bounds = array<i64: 8, 32>}]} {
    %c0 = arith.constant 0 : index
    %c0_0 = arith.constant 0 : index
    %c0_1 = arith.constant 0 : index
    %0 = vector.load %arg1[%c0, %c0_0, %c0_1] : memref<1x1x8xf32, #tpu.memory_space<vmem>>, vector<1x1x8xf32>
    %1 = vector.shape_cast %0 : vector<1x1x8xf32> to vector<1x8xf32>
    %c0_2 = arith.constant 0 : index
    %c0_3 = arith.constant 0 : index
    %2 = vector.load %arg2[%c0_2, %c0_3] : memref<8x96xbf16, #tpu.memory_space<vmem>>, vector<8x8xbf16>
    %c0_4 = arith.constant 0 : index
    %c32 = arith.constant 32 : index
    %3 = vector.load %arg2[%c0_4, %c32] : memref<8x96xbf16, #tpu.memory_space<vmem>>, vector<8x8xbf16>
    %c0_5 = arith.constant 0 : index
    %c64 = arith.constant 64 : index
    %4 = vector.load %arg2[%c0_5, %c64] : memref<8x96xbf16, #tpu.memory_space<vmem>>, vector<8x8xbf16>
    %cst = arith.constant dense<0.000000e+00> : vector<8x8xf32>
    %5 = tpu.matmul %2, %3, %cst {dimension_numbers = #tpu.dot_dimension_numbers<[1], [1], [0], [0], [0, 0, 1, 0], [], []>} : vector<8x8xbf16>, vector<8x8xbf16>, vector<8x8xf32> -> vector<8x8xf32>
    %6 = vector.broadcast %1 : vector<1x8xf32> to vector<8x8xf32>
    %7 = arith.addf %5, %6 : vector<8x8xf32>
    %cst_6 = arith.constant dense<0xFF800000> : vector<8xf32>
    %8 = vector.multi_reduction <maximumf>, %7, %cst_6 [1] : vector<8x8xf32> to vector<8xf32>
    %9 = vector.shape_cast %8 : vector<8xf32> to vector<8x1xf32>
    %10 = vector.broadcast %9 : vector<8x1xf32> to vector<8x8xf32>
    %11 = arith.subf %7, %10 : vector<8x8xf32>
    %12 = math.exp %11 : vector<8x8xf32>
    %cst_7 = arith.constant dense<0.000000e+00> : vector<8xf32>
    %13 = vector.multi_reduction <add>, %12, %cst_7 [1] : vector<8x8xf32> to vector<8xf32>
    %14 = vector.shape_cast %13 : vector<8xf32> to vector<8x1xf32>
    %15 = tpu.reciprocal %14 {approx = true} : vector<8x1xf32> -> vector<8x1xf32>
    %16 = vector.broadcast %15 : vector<8x1xf32> to vector<8x8xf32>
    %17 = arith.mulf %12, %16 : vector<8x8xf32>
    %18 = arith.truncf %17 : vector<8x8xf32> to vector<8x8xbf16>
    %cst_8 = arith.constant dense<0.000000e+00> : vector<8x8xf32>
    %19 = tpu.matmul %18, %4, %cst_8 {dimension_numbers = #tpu.dot_dimension_numbers<[1], [0], [0], [1], [0, 0, 1, 1], [], []>} : vector<8x8xbf16>, vector<8x8xbf16>, vector<8x8xf32> -> vector<8x8xf32>
    %20 = arith.truncf %19 : vector<8x8xf32> to vector<8x8xbf16>
    %c0_9 = arith.constant 0 : index
    %c8 = arith.constant 8 : index
    %21 = vector.load %arg2[%c0_9, %c8] : memref<8x96xbf16, #tpu.memory_space<vmem>>, vector<8x8xbf16>
    %c0_10 = arith.constant 0 : index
    %c40 = arith.constant 40 : index
    %22 = vector.load %arg2[%c0_10, %c40] : memref<8x96xbf16, #tpu.memory_space<vmem>>, vector<8x8xbf16>
    %c0_11 = arith.constant 0 : index
    %c72 = arith.constant 72 : index
    %23 = vector.load %arg2[%c0_11, %c72] : memref<8x96xbf16, #tpu.memory_space<vmem>>, vector<8x8xbf16>
    %cst_12 = arith.constant dense<0.000000e+00> : vector<8x8xf32>
    %24 = tpu.matmul %21, %22, %cst_12 {dimension_numbers = #tpu.dot_dimension_numbers<[1], [1], [0], [0], [0, 0, 1, 0], [], []>} : vector<8x8xbf16>, vector<8x8xbf16>, vector<8x8xf32> -> vector<8x8xf32>
    %25 = vector.broadcast %1 : vector<1x8xf32> to vector<8x8xf32>
    %26 = arith.addf %24, %25 : vector<8x8xf32>
    %cst_13 = arith.constant dense<0xFF800000> : vector<8xf32>
    %27 = vector.multi_reduction <maximumf>, %26, %cst_13 [1] : vector<8x8xf32> to vector<8xf32>
    %28 = vector.shape_cast %27 : vector<8xf32> to vector<8x1xf32>
    %29 = vector.broadcast %28 : vector<8x1xf32> to vector<8x8xf32>
    %30 = arith.subf %26, %29 : vector<8x8xf32>
    %31 = math.exp %30 : vector<8x8xf32>
    %cst_14 = arith.constant dense<0.000000e+00> : vector<8xf32>
    %32 = vector.multi_reduction <add>, %31, %cst_14 [1] : vector<8x8xf32> to vector<8xf32>
    %33 = vector.shape_cast %32 : vector<8xf32> to vector<8x1xf32>
    %34 = tpu.reciprocal %33 {approx = true} : vector<8x1xf32> -> vector<8x1xf32>
    %35 = vector.broadcast %34 : vector<8x1xf32> to vector<8x8xf32>
    %36 = arith.mulf %31, %35 : vector<8x8xf32>
    %37 = arith.truncf %36 : vector<8x8xf32> to vector<8x8xbf16>
    %cst_15 = arith.constant dense<0.000000e+00> : vector<8x8xf32>
    %38 = tpu.matmul %37, %23, %cst_15 {dimension_numbers = #tpu.dot_dimension_numbers<[1], [0], [0], [1], [0, 0, 1, 1], [], []>} : vector<8x8xbf16>, vector<8x8xbf16>, vector<8x8xf32> -> vector<8x8xf32>
    %39 = arith.truncf %38 : vector<8x8xf32> to vector<8x8xbf16>
    %c0_16 = arith.constant 0 : index
    %c16 = arith.constant 16 : index
    %40 = vector.load %arg2[%c0_16, %c16] : memref<8x96xbf16, #tpu.memory_space<vmem>>, vector<8x8xbf16>
    %c0_17 = arith.constant 0 : index
    %c48 = arith.constant 48 : index
    %41 = vector.load %arg2[%c0_17, %c48] : memref<8x96xbf16, #tpu.memory_space<vmem>>, vector<8x8xbf16>
    %c0_18 = arith.constant 0 : index
    %c80 = arith.constant 80 : index
    %42 = vector.load %arg2[%c0_18, %c80] : memref<8x96xbf16, #tpu.memory_space<vmem>>, vector<8x8xbf16>
    %cst_19 = arith.constant dense<0.000000e+00> : vector<8x8xf32>
    %43 = tpu.matmul %40, %41, %cst_19 {dimension_numbers = #tpu.dot_dimension_numbers<[1], [1], [0], [0], [0, 0, 1, 0], [], []>} : vector<8x8xbf16>, vector<8x8xbf16>, vector<8x8xf32> -> vector<8x8xf32>
    %44 = vector.broadcast %1 : vector<1x8xf32> to vector<8x8xf32>
    %45 = arith.addf %43, %44 : vector<8x8xf32>
    %cst_20 = arith.constant dense<0xFF800000> : vector<8xf32>
    %46 = vector.multi_reduction <maximumf>, %45, %cst_20 [1] : vector<8x8xf32> to vector<8xf32>
    %47 = vector.shape_cast %46 : vector<8xf32> to vector<8x1xf32>
    %48 = vector.broadcast %47 : vector<8x1xf32> to vector<8x8xf32>
    %49 = arith.subf %45, %48 : vector<8x8xf32>
    %50 = math.exp %49 : vector<8x8xf32>
    %cst_21 = arith.constant dense<0.000000e+00> : vector<8xf32>
    %51 = vector.multi_reduction <add>, %50, %cst_21 [1] : vector<8x8xf32> to vector<8xf32>
    %52 = vector.shape_cast %51 : vector<8xf32> to vector<8x1xf32>
    %53 = tpu.reciprocal %52 {approx = true} : vector<8x1xf32> -> vector<8x1xf32>
    %54 = vector.broadcast %53 : vector<8x1xf32> to vector<8x8xf32>
    %55 = arith.mulf %50, %54 : vector<8x8xf32>
    %56 = arith.truncf %55 : vector<8x8xf32> to vector<8x8xbf16>
    %cst_22 = arith.constant dense<0.000000e+00> : vector<8x8xf32>
    %57 = tpu.matmul %56, %42, %cst_22 {dimension_numbers = #tpu.dot_dimension_numbers<[1], [0], [0], [1], [0, 0, 1, 1], [], []>} : vector<8x8xbf16>, vector<8x8xbf16>, vector<8x8xf32> -> vector<8x8xf32>
    %58 = arith.truncf %57 : vector<8x8xf32> to vector<8x8xbf16>
    %c0_23 = arith.constant 0 : index
    %c24 = arith.constant 24 : index
    %59 = vector.load %arg2[%c0_23, %c24] : memref<8x96xbf16, #tpu.memory_space<vmem>>, vector<8x8xbf16>
    %c0_24 = arith.constant 0 : index
    %c56 = arith.constant 56 : index
    %60 = vector.load %arg2[%c0_24, %c56] : memref<8x96xbf16, #tpu.memory_space<vmem>>, vector<8x8xbf16>
    %c0_25 = arith.constant 0 : index
    %c88 = arith.constant 88 : index
    %61 = vector.load %arg2[%c0_25, %c88] : memref<8x96xbf16, #tpu.memory_space<vmem>>, vector<8x8xbf16>
    %cst_26 = arith.constant dense<0.000000e+00> : vector<8x8xf32>
    %62 = tpu.matmul %59, %60, %cst_26 {dimension_numbers = #tpu.dot_dimension_numbers<[1], [1], [0], [0], [0, 0, 1, 0], [], []>} : vector<8x8xbf16>, vector<8x8xbf16>, vector<8x8xf32> -> vector<8x8xf32>
    %63 = vector.broadcast %1 : vector<1x8xf32> to vector<8x8xf32>
    %64 = arith.addf %62, %63 : vector<8x8xf32>
    %cst_27 = arith.constant dense<0xFF800000> : vector<8xf32>
    %65 = vector.multi_reduction <maximumf>, %64, %cst_27 [1] : vector<8x8xf32> to vector<8xf32>
    %66 = vector.shape_cast %65 : vector<8xf32> to vector<8x1xf32>
    %67 = vector.broadcast %66 : vector<8x1xf32> to vector<8x8xf32>
    %68 = arith.subf %64, %67 : vector<8x8xf32>
    %69 = math.exp %68 : vector<8x8xf32>
    %cst_28 = arith.constant dense<0.000000e+00> : vector<8xf32>
    %70 = vector.multi_reduction <add>, %69, %cst_28 [1] : vector<8x8xf32> to vector<8xf32>
    %71 = vector.shape_cast %70 : vector<8xf32> to vector<8x1xf32>
    %72 = tpu.reciprocal %71 {approx = true} : vector<8x1xf32> -> vector<8x1xf32>
    %73 = vector.broadcast %72 : vector<8x1xf32> to vector<8x8xf32>
    %74 = arith.mulf %69, %73 : vector<8x8xf32>
    %75 = arith.truncf %74 : vector<8x8xf32> to vector<8x8xbf16>
    %cst_29 = arith.constant dense<0.000000e+00> : vector<8x8xf32>
    %76 = tpu.matmul %75, %61, %cst_29 {dimension_numbers = #tpu.dot_dimension_numbers<[1], [0], [0], [1], [0, 0, 1, 1], [], []>} : vector<8x8xbf16>, vector<8x8xbf16>, vector<8x8xf32> -> vector<8x8xf32>
    %77 = arith.truncf %76 : vector<8x8xf32> to vector<8x8xbf16>
    %78 = tpu.concatenate %20, %39, %58, %77 in 1 : vector<8x8xbf16>, vector<8x8xbf16>, vector<8x8xbf16>, vector<8x8xbf16> -> vector<8x32xbf16>
    %c0_30 = arith.constant 0 : index
    %c0_31 = arith.constant 0 : index
    %79 = vector.load %arg3[%c0_30, %c0_31] : memref<8x32xbf16, #tpu.memory_space<vmem>>, vector<8x32xbf16>
    tpu.vector_store %arg3[%c0_30, %c0_31], %78 {strides = array<i32>} : memref<8x32xbf16, #tpu.memory_space<vmem>>, vector<8x32xbf16>,
    return
  }
  func.func @transform_0(%arg0: i32) -> (i32, i32, i32) {
    %c0_i32 = arith.constant 0 : i32
    %c0_i32_0 = arith.constant 0 : i32
    %c0_i32_1 = arith.constant 0 : i32
    return %arg0, %c0_i32, %c0_i32_0 : i32, i32, i32
  }
  func.func @transform_1(%arg0: i32) -> (i32, i32) {
    %c0_i32 = arith.constant 0 : i32
    %c0_i32_0 = arith.constant 0 : i32
    return %arg0, %c0_i32 : i32, i32
  }
  func.func @transform_2(%arg0: i32) -> (i32, i32) {
    %c0_i32 = arith.constant 0 : i32
    %c0_i32_0 = arith.constant 0 : i32
    return %arg0, %c0_i32 : i32, i32
  }
}

module attributes {stable_mosaic.version = 11 : i64} {
  func.func @_matmul_kernel(%arg0: i32, %arg1: i32, %arg2: i32, %arg3: memref<16x64xbf16, #tpu.memory_space<vmem>>, %arg4: memref<64x32xbf16, #tpu.memory_space<vmem>>, %arg5: memref<1x32xf32, #tpu.memory_space<vmem>>, %arg6: memref<16x32xbf16, #tpu.memory_space<vmem>>, %arg7: memref<1x32xf32, #tpu.memory_space<vmem>>, %arg8: memref<1x32xf32, #tpu.memory_space<vmem>>, %arg9: memref<16x32xbf16, #tpu.memory_space<vmem>>, %arg10: memref<16x32xf32, #tpu.memory_space<vmem>>) attributes {dimension_semantics = [#tpu.dimension_semantics<parallel>, #tpu.dimension_semantics<parallel>, #tpu.dimension_semantics<arbitrary>], iteration_bounds = array<i64: 1, 1, 1>, scalar_prefetch = 0 : i64, scratch_operands = 1 : i64, tpu.core_type = #tpu.core_type<tc>, window_params = [{transform_indices = @transform_0, window_bounds = array<i64: 16, 64>}, {transform_indices = @transform_1, window_bounds = array<i64: 64, 32>}, {transform_indices = @transform_2, window_bounds = array<i64: 1, 32>}, {transform_indices = @transform_3, window_bounds = array<i64: 16, 32>}, {transform_indices = @transform_4, window_bounds = array<i64: 1, 32>}, {transform_indices = @transform_5, window_bounds = array<i64: 1, 32>}, {transform_indices = @transform_6, window_bounds = array<i64: 16, 32>}]} {
    %c0_i32 = arith.constant 0 : i32
    %0 = arith.cmpi eq, %arg2, %c0_i32 : i32
    %1 = arith.extui %0 : i1 to i32
    %c0_i32_0 = arith.constant 0 : i32
    %2 = arith.cmpi ne, %1, %c0_i32_0 : i32
    scf.if %2 {
      %cst_10 = arith.constant 0.000000e+00 : f32
      %12 = vector.broadcast %cst_10 : f32 to vector<16x32xf32>
      %c0_11 = arith.constant 0 : index
      %c0_12 = arith.constant 0 : index
      %13 = vector.load %arg10[%c0_11, %c0_12] : memref<16x32xf32, #tpu.memory_space<vmem>>, vector<16x32xf32>
      tpu.vector_store %arg10[%c0_11, %c0_12], %12 {strides = array<i32>} : memref<16x32xf32, #tpu.memory_space<vmem>>, vector<16x32xf32>,
    } else {
    }
    %c0 = arith.constant 0 : index
    %c0_1 = arith.constant 0 : index
    %3 = vector.load %arg10[%c0, %c0_1] : memref<16x32xf32, #tpu.memory_space<vmem>>, vector<16x32xf32>
    %c0_2 = arith.constant 0 : index
    %c0_3 = arith.constant 0 : index
    %4 = vector.load %arg3[%c0_2, %c0_3] : memref<16x64xbf16, #tpu.memory_space<vmem>>, vector<16x64xbf16>
    %c0_4 = arith.constant 0 : index
    %c0_5 = arith.constant 0 : index
    %5 = vector.load %arg4[%c0_4, %c0_5] : memref<64x32xbf16, #tpu.memory_space<vmem>>, vector<64x32xbf16>
    %cst = arith.constant dense<0.000000e+00> : vector<16x32xf32>
    %6 = tpu.matmul %4, %5, %cst {dimension_numbers = #tpu.dot_dimension_numbers<[1], [0], [0], [1], [0, 0, 1, 1], [], []>} : vector<16x64xbf16>, vector<64x32xbf16>, vector<16x32xf32> -> vector<16x32xf32>
    %7 = arith.addf %3, %6 : vector<16x32xf32>
    %c0_6 = arith.constant 0 : index
    %c0_7 = arith.constant 0 : index
    %8 = vector.load %arg10[%c0_6, %c0_7] : memref<16x32xf32, #tpu.memory_space<vmem>>, vector<16x32xf32>
    tpu.vector_store %arg10[%c0_6, %c0_7], %7 {strides = array<i32>} : memref<16x32xf32, #tpu.memory_space<vmem>>, vector<16x32xf32>,
    %c0_i32_8 = arith.constant 0 : i32
    %9 = arith.cmpi eq, %arg2, %c0_i32_8 : i32
    %10 = arith.extui %9 : i1 to i32
    %c0_i32_9 = arith.constant 0 : i32
    %11 = arith.cmpi ne, %10, %c0_i32_9 : i32
    scf.if %11 {
      %c0_10 = arith.constant 0 : index
      %c0_11 = arith.constant 0 : index
      %12 = vector.load %arg10[%c0_10, %c0_11] : memref<16x32xf32, #tpu.memory_space<vmem>>, vector<16x32xf32>
      %c0_12 = arith.constant 0 : index
      %c0_13 = arith.constant 0 : index
      %13 = vector.load %arg5[%c0_12, %c0_13] : memref<1x32xf32, #tpu.memory_space<vmem>>, vector<1x32xf32>
      %14 = vector.broadcast %13 : vector<1x32xf32> to vector<16x32xf32>
      %15 = arith.addf %12, %14 : vector<16x32xf32>
      %c0_14 = arith.constant 0 : index
      %c0_15 = arith.constant 0 : index
      %16 = vector.load %arg6[%c0_14, %c0_15] : memref<16x32xbf16, #tpu.memory_space<vmem>>, vector<16x32xbf16>
      %17 = arith.extf %16 : vector<16x32xbf16> to vector<16x32xf32>
      %18 = arith.addf %15, %17 : vector<16x32xf32>
      %cst_16 = arith.constant dense<0.000000e+00> : vector<16xf32>
      %19 = vector.multi_reduction <add>, %18, %cst_16 [1] : vector<16x32xf32> to vector<16xf32>
      %20 = vector.shape_cast %19 : vector<16xf32> to vector<16x1xf32>
      %cst_17 = arith.constant 3.200000e+01 : f32
      %21 = vector.broadcast %cst_17 : f32 to vector<16x1xf32>
      %22 = arith.divf %20, %21 : vector<16x1xf32>
      %23 = vector.broadcast %22 : vector<16x1xf32> to vector<16x32xf32>
      %24 = arith.subf %18, %23 : vector<16x32xf32>
      %25 = arith.mulf %24, %24 : vector<16x32xf32>
      %cst_18 = arith.constant dense<0.000000e+00> : vector<16xf32>
      %26 = vector.multi_reduction <add>, %25, %cst_18 [1] : vector<16x32xf32> to vector<16xf32>
      %27 = vector.shape_cast %26 : vector<16xf32> to vector<16x1xf32>
      %cst_19 = arith.constant 3.200000e+01 : f32
      %28 = vector.broadcast %cst_19 : f32 to vector<16x1xf32>
      %29 = arith.divf %27, %28 : vector<16x1xf32>
      %cst_20 = arith.constant 9.99999974E-6 : f32
      %30 = vector.broadcast %cst_20 : f32 to vector<16x1xf32>
      %31 = arith.addf %29, %30 : vector<16x1xf32>
      %32 = math.rsqrt %31 : vector<16x1xf32>
      %33 = vector.broadcast %32 : vector<16x1xf32> to vector<16x32xf32>
      %34 = arith.mulf %24, %33 : vector<16x32xf32>
      %c0_21 = arith.constant 0 : index
      %c0_22 = arith.constant 0 : index
      %35 = vector.load %arg7[%c0_21, %c0_22] : memref<1x32xf32, #tpu.memory_space<vmem>>, vector<1x32xf32>
      %36 = vector.broadcast %35 : vector<1x32xf32> to vector<16x32xf32>
      %37 = arith.mulf %34, %36 : vector<16x32xf32>
      %c0_23 = arith.constant 0 : index
      %c0_24 = arith.constant 0 : index
      %38 = vector.load %arg8[%c0_23, %c0_24] : memref<1x32xf32, #tpu.memory_space<vmem>>, vector<1x32xf32>
      %39 = vector.broadcast %38 : vector<1x32xf32> to vector<16x32xf32>
      %40 = arith.addf %37, %39 : vector<16x32xf32>
      %41 = arith.truncf %40 : vector<16x32xf32> to vector<16x32xbf16>
      %c0_25 = arith.constant 0 : index
      %c0_26 = arith.constant 0 : index
      %42 = vector.load %arg9[%c0_25, %c0_26] : memref<16x32xbf16, #tpu.memory_space<vmem>>, vector<16x32xbf16>
      tpu.vector_store %arg9[%c0_25, %c0_26], %41 {strides = array<i32>} : memref<16x32xbf16, #tpu.memory_space<vmem>>, vector<16x32xbf16>,
    } else {
    }
    return
  }
  func.func @transform_0(%arg0: i32, %arg1: i32, %arg2: i32) -> (i32, i32) {
    %c0_i32 = arith.constant 0 : i32
    return %arg0, %arg2 : i32, i32
  }
  func.func @transform_1(%arg0: i32, %arg1: i32, %arg2: i32) -> (i32, i32) {
    %c0_i32 = arith.constant 0 : i32
    return %arg2, %arg1 : i32, i32
  }
  func.func @transform_2(%arg0: i32, %arg1: i32, %arg2: i32) -> (i32, i32) {
    %c0_i32 = arith.constant 0 : i32
    %c0_i32_0 = arith.constant 0 : i32
    return %c0_i32, %arg1 : i32, i32
  }
  func.func @transform_3(%arg0: i32, %arg1: i32, %arg2: i32) -> (i32, i32) {
    %c0_i32 = arith.constant 0 : i32
    return %arg0, %arg1 : i32, i32
  }
  func.func @transform_4(%arg0: i32, %arg1: i32, %arg2: i32) -> (i32, i32) {
    %c0_i32 = arith.constant 0 : i32
    %c0_i32_0 = arith.constant 0 : i32
    return %c0_i32, %arg1 : i32, i32
  }
  func.func @transform_5(%arg0: i32, %arg1: i32, %arg2: i32) -> (i32, i32) {
    %c0_i32 = arith.constant 0 : i32
    %c0_i32_0 = arith.constant 0 : i32
    return %c0_i32, %arg1 : i32, i32
  }
  func.func @transform_6(%arg0: i32, %arg1: i32, %arg2: i32) -> (i32, i32) {
    %c0_i32 = arith.constant 0 : i32
    return %arg0, %arg1 : i32, i32
  }
}

module attributes {stable_mosaic.version = 11 : i64} {
  func.func @_matmul_kernel(%arg0: i32, %arg1: i32, %arg2: i32, %arg3: memref<16x32xbf16, #tpu.memory_space<vmem>>, %arg4: memref<32x128xbf16, #tpu.memory_space<vmem>>, %arg5: memref<1x128xf32, #tpu.memory_space<vmem>>, %arg6: memref<16x128xf32, #tpu.memory_space<vmem>>, %arg7: memref<16x128xf32, #tpu.memory_space<vmem>>) attributes {dimension_semantics = [#tpu.dimension_semantics<parallel>, #tpu.dimension_semantics<parallel>, #tpu.dimension_semantics<arbitrary>], iteration_bounds = array<i64: 1, 1, 1>, scalar_prefetch = 0 : i64, scratch_operands = 1 : i64, tpu.core_type = #tpu.core_type<tc>, window_params = [{transform_indices = @transform_0, window_bounds = array<i64: 16, 32>}, {transform_indices = @transform_1, window_bounds = array<i64: 32, 128>}, {transform_indices = @transform_2, window_bounds = array<i64: 1, 128>}, {transform_indices = @transform_3, window_bounds = array<i64: 16, 128>}]} {
    %c0_i32 = arith.constant 0 : i32
    %0 = arith.cmpi eq, %arg2, %c0_i32 : i32
    %1 = arith.extui %0 : i1 to i32
    %c0_i32_0 = arith.constant 0 : i32
    %2 = arith.cmpi ne, %1, %c0_i32_0 : i32
    scf.if %2 {
      %cst_10 = arith.constant 0.000000e+00 : f32
      %12 = vector.broadcast %cst_10 : f32 to vector<16x128xf32>
      %c0_11 = arith.constant 0 : index
      %c0_12 = arith.constant 0 : index
      %13 = vector.load %arg7[%c0_11, %c0_12] : memref<16x128xf32, #tpu.memory_space<vmem>>, vector<16x128xf32>
      tpu.vector_store %arg7[%c0_11, %c0_12], %12 {strides = array<i32>} : memref<16x128xf32, #tpu.memory_space<vmem>>, vector<16x128xf32>,
    } else {
    }
    %c0 = arith.constant 0 : index
    %c0_1 = arith.constant 0 : index
    %3 = vector.load %arg7[%c0, %c0_1] : memref<16x128xf32, #tpu.memory_space<vmem>>, vector<16x128xf32>
    %c0_2 = arith.constant 0 : index
    %c0_3 = arith.constant 0 : index
    %4 = vector.load %arg3[%c0_2, %c0_3] : memref<16x32xbf16, #tpu.memory_space<vmem>>, vector<16x32xbf16>
    %c0_4 = arith.constant 0 : index
    %c0_5 = arith.constant 0 : index
    %5 = vector.load %arg4[%c0_4, %c0_5] : memref<32x128xbf16, #tpu.memory_space<vmem>>, vector<32x128xbf16>
    %cst = arith.constant dense<0.000000e+00> : vector<16x128xf32>
    %6 = tpu.matmul %4, %5, %cst {dimension_numbers = #tpu.dot_dimension_numbers<[1], [0], [0], [1], [0, 0, 1, 1], [], []>} : vector<16x32xbf16>, vector<32x128xbf16>, vector<16x128xf32> -> vector<16x128xf32>
    %7 = arith.addf %3, %6 : vector<16x128xf32>
    %c0_6 = arith.constant 0 : index
    %c0_7 = arith.constant 0 : index
    %8 = vector.load %arg7[%c0_6, %c0_7] : memref<16x128xf32, #tpu.memory_space<vmem>>, vector<16x128xf32>
    tpu.vector_store %arg7[%c0_6, %c0_7], %7 {strides = array<i32>} : memref<16x128xf32, #tpu.memory_space<vmem>>, vector<16x128xf32>,
    %c0_i32_8 = arith.constant 0 : i32
    %9 = arith.cmpi eq, %arg2, %c0_i32_8 : i32
    %10 = arith.extui %9 : i1 to i32
    %c0_i32_9 = arith.constant 0 : i32
    %11 = arith.cmpi ne, %10, %c0_i32_9 : i32
    scf.if %11 {
      %c0_10 = arith.constant 0 : index
      %c0_11 = arith.constant 0 : index
      %12 = vector.load %arg7[%c0_10, %c0_11] : memref<16x128xf32, #tpu.memory_space<vmem>>, vector<16x128xf32>
      %c0_12 = arith.constant 0 : index
      %c0_13 = arith.constant 0 : index
      %13 = vector.load %arg5[%c0_12, %c0_13] : memref<1x128xf32, #tpu.memory_space<vmem>>, vector<1x128xf32>
      %14 = vector.broadcast %13 : vector<1x128xf32> to vector<16x128xf32>
      %15 = arith.addf %12, %14 : vector<16x128xf32>
      %c0_14 = arith.constant 0 : index
      %c0_15 = arith.constant 0 : index
      %16 = vector.load %arg6[%c0_14, %c0_15] : memref<16x128xf32, #tpu.memory_space<vmem>>, vector<16x128xf32>
      tpu.vector_store %arg6[%c0_14, %c0_15], %15 {strides = array<i32>} : memref<16x128xf32, #tpu.memory_space<vmem>>, vector<16x128xf32>,
    } else {
    }
    return
  }
  func.func @transform_0(%arg0: i32, %arg1: i32, %arg2: i32) -> (i32, i32) {
    %c0_i32 = arith.constant 0 : i32
    return %arg0, %arg2 : i32, i32
  }
  func.func @transform_1(%arg0: i32, %arg1: i32, %arg2: i32) -> (i32, i32) {
    %c0_i32 = arith.constant 0 : i32
    return %arg2, %arg1 : i32, i32
  }
  func.func @transform_2(%arg0: i32, %arg1: i32, %arg2: i32) -> (i32, i32) {
    %c0_i32 = arith.constant 0 : i32
    %c0_i32_0 = arith.constant 0 : i32
    return %c0_i32, %arg1 : i32, i32
  }
  func.func @transform_3(%arg0: i32, %arg1: i32, %arg2: i32) -> (i32, i32) {
    %c0_i32 = arith.constant 0 : i32
    return %arg0, %arg1 : i32, i32
  }
}

</mosaic_0001>

<llo_original>
// kernel: kipisi_forward.11
$region0: #{kipisi_forward.11}
  #allocation0 [shape = 'u32[]', space=smem, size = 0x4, offset = 0x4, fixed_abs, tag = 'smem constant byte address 0x4 - core index']
  #allocation1 [shape = 'u32[72,128]{1,0:T(1,128)}', space=vmem, size = 0x9000, scoped, tag = 'internal scratch']
  #allocation2 [shape = 'f32[16,96]{1,0:T(8,128)}', space=vmem, size = 0x2000, scoped, tag = 'scratch operand']
  %s0 = inlined_call_operand.vmem [shape: bf16[16,32], index: 0, kind: input, shape index: {}]
  %s1 = inlined_call_operand.vmem [shape: bf16[32,96], index: 1, kind: input, shape index: {}]
  %s2 = inlined_call_operand.vmem [shape: f32[1,96], index: 2, kind: input, shape index: {}]
  %s3 = inlined_call_operand.vmem [shape: bf16[16,96], index: 3, kind: output, shape index: {}]
  %s4 = sld [smem:[#allocation0]]
  $region30: #{kipisi_forward.11} parent=0
    _
  %s6 = ssub.s32 1, %s4
  %s7 = scalar_select 0, %s6, %s4
  // Predicated region
  $region2: #{kipisi_forward.11} parent=0 // pred_check
    _
  $region3: #{kipisi_forward.11} parent=0 // pred_check_branch
    %9 = sbr.rel (0) target = $region5
  $region4: #{kipisi_forward.11} parent=0 // pred_region
    _
  $region5: #{kipisi_forward.11} parent=0 // pred_fallthru
    _
  // Predicated region
  $region6: #{kipisi_forward.11} parent=0 // pred_check
    _
  $region7: #{kipisi_forward.11} parent=0 // pred_check_branch
    %11 = sbr.rel (0) target = $region9
  $region8: #{kipisi_forward.11} parent=0 // pred_region
    _
  $region9: #{kipisi_forward.11} parent=0 // pred_fallthru
    _
  // Predicated region
  $region10: #{kipisi_forward.11} parent=0 // pred_check
    _
  $region11: #{kipisi_forward.11} parent=0 // pred_check_branch
    %13 = sbr.rel (0) target = $region13
  $region12: #{kipisi_forward.11} parent=0 // pred_region
    _
  $region13: #{kipisi_forward.11} parent=0 // pred_fallthru
    _
  %p15 = scmp.eq.s32.totalorder 0, 0
  // Predicated region
  $region14: #{kipisi_forward.11} parent=0 // pred_check
    %p16 = pneg %p15
  $region15: #{kipisi_forward.11} parent=0 // pred_check_branch
    %18 = sbr.rel (%p16) target = $region17
  $region16: #{kipisi_forward.11} parent=0 // pred_region
    %vm19 = vcmask 785408
    %20 = vst.msk [vmem:[#allocation2] sm:$0xff] %vm19, 0.0
    %21 = vst.msk [vmem:[#allocation2 + $0x8] sm:$0xff] %vm19, 0.0
  $region17: #{kipisi_forward.11} parent=0 // pred_fallthru
    _
  %v22 = vld [vmem:[#allocation2] sm:$0xff]
  %v23 = vld [vmem:[#allocation2 + $0x8] sm:$0xff]
  %v24 = vld [vmem:[%s0] sm:$0xf]
  %v25 = vld [vmem:[%s0 + $0x4] sm:$0xf]
  %v26 = vld [vmem:[%s1] sm:$0xf]
  %v27 = vld [vmem:[%s1 + $0x4] sm:$0xf]
  %v28 = vld [vmem:[%s1 + $0x8] sm:$0xf]
  %v29 = vld [vmem:[%s1 + $0xc] sm:$0xf]
  %v32 = vunpack.c.l.b16 %v24
  %v33 = vunpack.c.l.b16 %v25
  %v34 = vpack.c.b16 %v33, %v32
  %v39 = vunpack.c.l.b16 %v26
  %v40 = vunpack.c.l.b16 %v27
  %v41 = vunpack.c.l.b16 %v28
  %v42 = vunpack.c.l.b16 %v29
  %v43 = vpack.c.b16 %v40, %v39
  %v44 = vpack.c.b16 %v42, %v41
  %vm47 = vcmask 261120
  %v49 = vsel %vm47, %v34, 0
  %51 = vmatpush.bf16.msra.mxu0 0
  %52 = vmatpush.bf16.msra.mxu0 0
  %53 = vmatpush.bf16.msra.mxu0 0
  %54 = vmatpush.bf16.msra.mxu0 0
  %55 = vmatpush.bf16.msra.mxu0 0
  %56 = vmatpush.bf16.msra.mxu0 0
  %57 = vmatpush.bf16.msra.mxu0 %v44
  %58 = vmatpush.bf16.msra.mxu0 %v43
  %59 = vmatmul.bf16.gmra.mxu0 %v49
  %v60 = vpop.f32.mrf.mxu0
  %v61 = vadd.f32 0.0, %v60
  %v62 = vpop.f32.mrf.mxu0
  %v63 = vadd.f32 0.0, %v62
  %64 = vdwg.mxu0
  %v65 = vadd.f32 %v22, %v61
  %v66 = vadd.f32 %v23, %v63
  %vm67 = vcmask 785408
  %68 = vst.msk [vmem:[#allocation2] sm:$0xff] %vm67, %v65
  %69 = vst.msk [vmem:[#allocation2 + $0x8] sm:$0xff] %vm67, %v66
  // Predicated region
  $region18: #{kipisi_forward.11} parent=0 // pred_check
    %p70 = pneg %p15
  $region19: #{kipisi_forward.11} parent=0 // pred_check_branch
    %72 = sbr.rel (%p70) target = $region21
  $region20: #{kipisi_forward.11} parent=0 // pred_region
    %v73 = vld [vmem:[#allocation2] sm:$0xff]
    %v74 = vld [vmem:[#allocation2 + $0x8] sm:$0xff]
    %v75 = vld [vmem:[%s2] sm:$0x1]
    %v77 = vperm.slane %v75, 0
    %v79 = vadd.f32 %v73, %v77
    %v80 = vadd.f32 %v74, %v77
    %v81 = vpack.c.bf16 %v79, %v79
    %v82 = vpack.c.bf16 %v80, %v80
    %vm83 = vcmask 781312
    %84 = vst.msk [vmem:[%s3] sm:$0xf] %vm83, %v81
    %85 = vst.msk [vmem:[%s3 + $0x4] sm:$0xf] %vm83, %v82
  $region21: #{kipisi_forward.11} parent=0 // pred_fallthru
    _
  // Predicated region
  $region22: #{kipisi_forward.11} parent=0 // pred_check
    _
  $region23: #{kipisi_forward.11} parent=0 // pred_check_branch
    %87 = sbr.rel (0) target = $region25
  $region24: #{kipisi_forward.11} parent=0 // pred_region
    _
  $region25: #{kipisi_forward.11} parent=0 // pred_fallthru
    _
  // Predicated region
  $region26: #{kipisi_forward.11} parent=0 // pred_check
    _
  $region27: #{kipisi_forward.11} parent=0 // pred_check_branch
    %89 = sbr.rel (0) target = $region29
  $region28: #{kipisi_forward.11} parent=0 // pred_region
    _
  $region29: #{kipisi_forward.11} parent=0 // pred_fallthru
    _

// kernel: kipisi_forward.14
$region0: #{kipisi_forward.14}
  #allocation0 [shape = 'u32[]', space=smem, size = 0x4, offset = 0x4, fixed_abs, tag = 'smem constant byte address 0x4 - core index']
  #allocation1 [shape = 'u32[72,128]{1,0:T(1,128)}', space=vmem, size = 0x9000, scoped, tag = 'internal scratch']
  #allocation2 [shape = 'f32[16,64]{1,0:T(8,128)}', space=vmem, size = 0x2000, scoped, tag = 'scratch operand']
  %s0 = inlined_call_operand.vmem [shape: bf16[16,32], index: 0, kind: input, shape index: {}]
  %s1 = inlined_call_operand.vmem [shape: bf16[32,64], index: 1, kind: input, shape index: {}]
  %s2 = inlined_call_operand.vmem [shape: f32[1,64], index: 2, kind: input, shape index: {}]
  %s3 = inlined_call_operand.vmem [shape: bf16[16,64], index: 3, kind: output, shape index: {}]
  %s4 = sld [smem:[#allocation0]]
  $region30: #{kipisi_forward.14} parent=0
    _
  %s6 = ssub.s32 1, %s4
  %s7 = scalar_select 0, %s6, %s4
  // Predicated region
  $region2: #{kipisi_forward.14} parent=0 // pred_check
    _
  $region3: #{kipisi_forward.14} parent=0 // pred_check_branch
    %9 = sbr.rel (0) target = $region5
  $region4: #{kipisi_forward.14} parent=0 // pred_region
    _
  $region5: #{kipisi_forward.14} parent=0 // pred_fallthru
    _
  // Predicated region
  $region6: #{kipisi_forward.14} parent=0 // pred_check
    _
  $region7: #{kipisi_forward.14} parent=0 // pred_check_branch
    %11 = sbr.rel (0) target = $region9
  $region8: #{kipisi_forward.14} parent=0 // pred_region
    _
  $region9: #{kipisi_forward.14} parent=0 // pred_fallthru
    _
  // Predicated region
  $region10: #{kipisi_forward.14} parent=0 // pred_check
    _
  $region11: #{kipisi_forward.14} parent=0 // pred_check_branch
    %13 = sbr.rel (0) target = $region13
  $region12: #{kipisi_forward.14} parent=0 // pred_region
    _
  $region13: #{kipisi_forward.14} parent=0 // pred_fallthru
    _
  %p15 = scmp.eq.s32.totalorder 0, 0
  // Predicated region
  $region14: #{kipisi_forward.14} parent=0 // pred_check
    %p16 = pneg %p15
  $region15: #{kipisi_forward.14} parent=0 // pred_check_branch
    %18 = sbr.rel (%p16) target = $region17
  $region16: #{kipisi_forward.14} parent=0 // pred_region
    %vm19 = vcmask 523264
    %20 = vst.msk [vmem:[#allocation2] sm:$0xff] %vm19, 0.0
    %21 = vst.msk [vmem:[#allocation2 + $0x8] sm:$0xff] %vm19, 0.0
  $region17: #{kipisi_forward.14} parent=0 // pred_fallthru
    _
  %v22 = vld [vmem:[#allocation2] sm:$0xff]
  %v23 = vld [vmem:[#allocation2 + $0x8] sm:$0xff]
  %v24 = vld [vmem:[%s0] sm:$0xf]
  %v25 = vld [vmem:[%s0 + $0x4] sm:$0xf]
  %v26 = vld [vmem:[%s1] sm:$0xf]
  %v27 = vld [vmem:[%s1 + $0x4] sm:$0xf]
  %v28 = vld [vmem:[%s1 + $0x8] sm:$0xf]
  %v29 = vld [vmem:[%s1 + $0xc] sm:$0xf]
  %v32 = vunpack.c.l.b16 %v24
  %v33 = vunpack.c.l.b16 %v25
  %v34 = vpack.c.b16 %v33, %v32
  %v39 = vunpack.c.l.b16 %v26
  %v40 = vunpack.c.l.b16 %v27
  %v41 = vunpack.c.l.b16 %v28
  %v42 = vunpack.c.l.b16 %v29
  %v43 = vpack.c.b16 %v40, %v39
  %v44 = vpack.c.b16 %v42, %v41
  %vm47 = vcmask 261120
  %v49 = vsel %vm47, %v34, 0
  %51 = vmatpush.bf16.msra.mxu0 0
  %52 = vmatpush.bf16.msra.mxu0 0
  %53 = vmatpush.bf16.msra.mxu0 0
  %54 = vmatpush.bf16.msra.mxu0 0
  %55 = vmatpush.bf16.msra.mxu0 0
  %56 = vmatpush.bf16.msra.mxu0 0
  %57 = vmatpush.bf16.msra.mxu0 %v44
  %58 = vmatpush.bf16.msra.mxu0 %v43
  %59 = vmatmul.bf16.gmra.mxu0 %v49
  %v60 = vpop.f32.mrf.mxu0
  %v61 = vadd.f32 0.0, %v60
  %v62 = vpop.f32.mrf.mxu0
  %v63 = vadd.f32 0.0, %v62
  %64 = vdwg.mxu0
  %v65 = vadd.f32 %v22, %v61
  %v66 = vadd.f32 %v23, %v63
  %vm67 = vcmask 523264
  %68 = vst.msk [vmem:[#allocation2] sm:$0xff] %vm67, %v65
  %69 = vst.msk [vmem:[#allocation2 + $0x8] sm:$0xff] %vm67, %v66
  // Predicated region
  $region18: #{kipisi_forward.14} parent=0 // pred_check
    %p70 = pneg %p15
  $region19: #{kipisi_forward.14} parent=0 // pred_check_branch
    %72 = sbr.rel (%p70) target = $region21
  $region20: #{kipisi_forward.14} parent=0 // pred_region
    %v73 = vld [vmem:[#allocation2] sm:$0xff]
    %v74 = vld [vmem:[#allocation2 + $0x8] sm:$0xff]
    %v75 = vld [vmem:[%s2] sm:$0x1]
    %v77 = vperm.slane %v75, 0
    %v79 = vadd.f32 %v73, %v77
    %v80 = vadd.f32 %v74, %v77
    %v81 = vmax.f32 %v79, 0.0
    %v82 = vmax.f32 %v80, 0.0
    %v83 = vpack.c.bf16 %v81, %v81
    %v84 = vpack.c.bf16 %v82, %v82
    %vm85 = vcmask 519168
    %86 = vst.msk [vmem:[%s3] sm:$0xf] %vm85, %v83
    %87 = vst.msk [vmem:[%s3 + $0x4] sm:$0xf] %vm85, %v84
  $region21: #{kipisi_forward.14} parent=0 // pred_fallthru
    _
  // Predicated region
  $region22: #{kipisi_forward.14} parent=0 // pred_check
    _
  $region23: #{kipisi_forward.14} parent=0 // pred_check_branch
    %89 = sbr.rel (0) target = $region25
  $region24: #{kipisi_forward.14} parent=0 // pred_region
    _
  $region25: #{kipisi_forward.14} parent=0 // pred_fallthru
    _
  // Predicated region
  $region26: #{kipisi_forward.14} parent=0 // pred_check
    _
  $region27: #{kipisi_forward.14} parent=0 // pred_check_branch
    %91 = sbr.rel (0) target = $region29
  $region28: #{kipisi_forward.14} parent=0 // pred_region
    _
  $region29: #{kipisi_forward.14} parent=0 // pred_fallthru
    _

// kernel: kipisi_forward.13
$region0: #{kipisi_forward.13}
  #allocation0 [shape = 'u32[]', space=smem, size = 0x4, offset = 0x4, fixed_abs, tag = 'smem constant byte address 0x4 - core index']
  #allocation1 [shape = 'u32[72,128]{1,0:T(1,128)}', space=vmem, size = 0x9000, scoped, tag = 'internal scratch']
  #allocation2 [shape = 'f32[16,32]{1,0:T(8,128)}', space=vmem, size = 0x2000, scoped, tag = 'scratch operand']
  %s0 = inlined_call_operand.vmem [shape: bf16[16,32], index: 0, kind: input, shape index: {}]
  %s1 = inlined_call_operand.vmem [shape: bf16[32,32], index: 1, kind: input, shape index: {}]
  %s2 = inlined_call_operand.vmem [shape: f32[1,32], index: 2, kind: input, shape index: {}]
  %s3 = inlined_call_operand.vmem [shape: bf16[16,32], index: 3, kind: input, shape index: {}]
  %s4 = inlined_call_operand.vmem [shape: f32[1,32], index: 4, kind: input, shape index: {}]
  %s5 = inlined_call_operand.vmem [shape: f32[1,32], index: 5, kind: input, shape index: {}]
  %s6 = inlined_call_operand.vmem [shape: bf16[16,32], index: 6, kind: output, shape index: {}]
  %s7 = sld [smem:[#allocation0]]
  $region42: #{kipisi_forward.13} parent=0
    _
  %s9 = ssub.s32 1, %s7
  %s10 = scalar_select 0, %s9, %s7
  // Predicated region
  $region2: #{kipisi_forward.13} parent=0 // pred_check
    _
  $region3: #{kipisi_forward.13} parent=0 // pred_check_branch
    %12 = sbr.rel (0) target = $region5
  $region4: #{kipisi_forward.13} parent=0 // pred_region
    _
  $region5: #{kipisi_forward.13} parent=0 // pred_fallthru
    _
  // Predicated region
  $region6: #{kipisi_forward.13} parent=0 // pred_check
    _
  $region7: #{kipisi_forward.13} parent=0 // pred_check_branch
    %14 = sbr.rel (0) target = $region9
  $region8: #{kipisi_forward.13} parent=0 // pred_region
    _
  $region9: #{kipisi_forward.13} parent=0 // pred_fallthru
    _
  // Predicated region
  $region10: #{kipisi_forward.13} parent=0 // pred_check
    _
  $region11: #{kipisi_forward.13} parent=0 // pred_check_branch
    %16 = sbr.rel (0) target = $region13
  $region12: #{kipisi_forward.13} parent=0 // pred_region
    _
  $region13: #{kipisi_forward.13} parent=0 // pred_fallthru
    _
  // Predicated region
  $region14: #{kipisi_forward.13} parent=0 // pred_check
    _
  $region15: #{kipisi_forward.13} parent=0 // pred_check_branch
    %18 = sbr.rel (0) target = $region17
  $region16: #{kipisi_forward.13} parent=0 // pred_region
    _
  $region17: #{kipisi_forward.13} parent=0 // pred_fallthru
    _
  // Predicated region
  $region18: #{kipisi_forward.13} parent=0 // pred_check
    _
  $region19: #{kipisi_forward.13} parent=0 // pred_check_branch
    %20 = sbr.rel (0) target = $region21
  $region20: #{kipisi_forward.13} parent=0 // pred_region
    _
  $region21: #{kipisi_forward.13} parent=0 // pred_fallthru
    _
  // Predicated region
  $region22: #{kipisi_forward.13} parent=0 // pred_check
    _
  $region23: #{kipisi_forward.13} parent=0 // pred_check_branch
    %22 = sbr.rel (0) target = $region25
  $region24: #{kipisi_forward.13} parent=0 // pred_region
    _
  $region25: #{kipisi_forward.13} parent=0 // pred_fallthru
    _
  %p24 = scmp.eq.s32.totalorder 0, 0
  // Predicated region
  $region26: #{kipisi_forward.13} parent=0 // pred_check
    %p25 = pneg %p24
  $region27: #{kipisi_forward.13} parent=0 // pred_check_branch
    %27 = sbr.rel (%p25) target = $region29
  $region28: #{kipisi_forward.13} parent=0 // pred_region
    %vm28 = vcmask 261120
    %29 = vst.msk [vmem:[#allocation2] sm:$0xff] %vm28, 0.0
    %30 = vst.msk [vmem:[#allocation2 + $0x8] sm:$0xff] %vm28, 0.0
  $region29: #{kipisi_forward.13} parent=0 // pred_fallthru
    _
  %v31 = vld [vmem:[#allocation2] sm:$0xff]
  %v32 = vld [vmem:[#allocation2 + $0x8] sm:$0xff]
  %v33 = vld [vmem:[%s0] sm:$0xf]
  %v34 = vld [vmem:[%s0 + $0x4] sm:$0xf]
  %v35 = vld [vmem:[%s1] sm:$0xf]
  %v36 = vld [vmem:[%s1 + $0x4] sm:$0xf]
  %v37 = vld [vmem:[%s1 + $0x8] sm:$0xf]
  %v38 = vld [vmem:[%s1 + $0xc] sm:$0xf]
  %v41 = vunpack.c.l.b16 %v33
  %v42 = vunpack.c.l.b16 %v34
  %v43 = vpack.c.b16 %v42, %v41
  %v48 = vunpack.c.l.b16 %v35
  %v49 = vunpack.c.l.b16 %v36
  %v50 = vunpack.c.l.b16 %v37
  %v51 = vunpack.c.l.b16 %v38
  %v52 = vpack.c.b16 %v49, %v48
  %v53 = vpack.c.b16 %v51, %v50
  %vm56 = vcmask 261120
  %v58 = vsel %vm56, %v43, 0
  %60 = vmatpush.bf16.msra.mxu0 0
  %61 = vmatpush.bf16.msra.mxu0 0
  %62 = vmatpush.bf16.msra.mxu0 0
  %63 = vmatpush.bf16.msra.mxu0 0
  %64 = vmatpush.bf16.msra.mxu0 0
  %65 = vmatpush.bf16.msra.mxu0 0
  %66 = vmatpush.bf16.msra.mxu0 %v53
  %67 = vmatpush.bf16.msra.mxu0 %v52
  %68 = vmatmul.bf16.gmra.mxu0 %v58
  %v69 = vpop.f32.mrf.mxu0
  %v70 = vadd.f32 0.0, %v69
  %v71 = vpop.f32.mrf.mxu0
  %v72 = vadd.f32 0.0, %v71
  %73 = vdwg.mxu0
  %v74 = vadd.f32 %v31, %v70
  %v75 = vadd.f32 %v32, %v72
  %76 = vst.msk [vmem:[#allocation2] sm:$0xff] %vm56, %v74
  %77 = vst.msk [vmem:[#allocation2 + $0x8] sm:$0xff] %vm56, %v75
  // Predicated region
  $region30: #{kipisi_forward.13} parent=0 // pred_check
    %p78 = pneg %p24
  $region31: #{kipisi_forward.13} parent=0 // pred_check_branch
    %80 = sbr.rel (%p78) target = $region33
  $region32: #{kipisi_forward.13} parent=0 // pred_region
    %v81 = vld [vmem:[#allocation2] sm:$0xff]
    %v82 = vld [vmem:[#allocation2 + $0x8] sm:$0xff]
    %v83 = vld [vmem:[%s2] sm:$0x1]
    %v85 = vperm.slane %v83, 0
    %v87 = vadd.f32 %v81, %v85
    %v88 = vadd.f32 %v82, %v85
    %v89 = vld [vmem:[%s3] sm:$0xf]
    %v90 = vld [vmem:[%s3 + $0x4] sm:$0xf]
    %v91 = vunpack.c.l.bf16 %v89
    %v92 = vunpack.c.l.bf16 %v90
    %v93 = vadd.f32 %v87, %v91
    %v94 = vadd.f32 %v88, %v92
    %v95 = vsel %vm56, %v93, 0.0
    %96 = vadd.xlane.f32.xlu0 %v95
    %v97 = vpop.xlane.xlu0 %96
    %v98 = vsel %vm56, %v94, 0.0
    %99 = vadd.xlane.f32.xlu0 %v98
    %v100 = vpop.xlane.xlu0 %99
    %v101 = vrcp.pop 32.0
    %v102 = vmul.f32 32.0, %v101
    %v103 = vsub.f32 1.0, %v102
    %v104 = vmul.f32 %v101, %v103
    %v105 = vadd.f32 %v101, %v104
    %vm106 = vweird.f32 %v101
    %v107 = vsel %vm106, %v101, %v105
    %v108 = vmul.f32 %v97, %v107
    %v109 = vmul.f32 %v100, %v107
    %v110 = vsub.f32 %v93, %v108
    %v111 = vsub.f32 %v94, %v109
    %v112 = vmul.f32 %v110, %v110
    %v113 = vmul.f32 %v111, %v111
    %v114 = vsel %vm56, %v112, 0.0
    %115 = vadd.xlane.f32.xlu0 %v114
    %v116 = vpop.xlane.xlu0 %115
    %v117 = vsel %vm56, %v113, 0.0
    %118 = vadd.xlane.f32.xlu0 %v117
    %v119 = vpop.xlane.xlu0 %118
    %v120 = vmul.f32 %v116, %v107
    %v121 = vmul.f32 %v119, %v107
    %v122 = vadd.f32 %v120, 1e-05
    %v123 = vadd.f32 %v121, 1e-05
    %v124 = vrsqrt.pop %v122
    %v125 = vmul.f32 %v124, %v122
    %v126 = vmul.f32 %v125, %v124
    %v127 = vmul.f32 0.5, %v126
    %v128 = vsub.f32 1.5, %v127
    %v129 = vmul.f32 %v124, %v128
    %vm130 = vweird.f32 %v122
    %vm131 = vweird.f32 %v124
    %vm132 = vmor %vm130, %vm131
    %v133 = vsel %vm132, %v124, %v129
    %v134 = vrsqrt.pop %v123
    %v135 = vmul.f32 %v134, %v123
    %v136 = vmul.f32 %v135, %v134
    %v137 = vmul.f32 0.5, %v136
    %v138 = vsub.f32 1.5, %v137
    %v139 = vmul.f32 %v134, %v138
    %vm140 = vweird.f32 %v123
    %vm141 = vweird.f32 %v134
    %vm142 = vmor %vm140, %vm141
    %v143 = vsel %vm142, %v134, %v139
    %v144 = vmul.f32 %v110, %v133
    %v145 = vmul.f32 %v111, %v143
    %v146 = vld [vmem:[%s4] sm:$0x1]
    %v148 = vperm.slane %v146, 0
    %v150 = vmul.f32 %v144, %v148
    %v151 = vmul.f32 %v145, %v148
    %v152 = vld [vmem:[%s5] sm:$0x1]
    %v154 = vperm.slane %v152, 0
    %v156 = vadd.f32 %v150, %v154
    %v157 = vadd.f32 %v151, %v154
    %v158 = vpack.c.bf16 %v156, %v156
    %v159 = vpack.c.bf16 %v157, %v157
    %vm160 = vcmask 257024
    %161 = vst.msk [vmem:[%s6] sm:$0xf] %vm160, %v158
    %162 = vst.msk [vmem:[%s6 + $0x4] sm:$0xf] %vm160, %v159
  $region33: #{kipisi_forward.13} parent=0 // pred_fallthru
    _
  // Predicated region
  $region34: #{kipisi_forward.13} parent=0 // pred_check
    _
  $region35: #{kipisi_forward.13} parent=0 // pred_check_branch
    %164 = sbr.rel (0) target = $region37
  $region36: #{kipisi_forward.13} parent=0 // pred_region
    _
  $region37: #{kipisi_forward.13} parent=0 // pred_fallthru
    _
  // Predicated region
  $region38: #{kipisi_forward.13} parent=0 // pred_check
    _
  $region39: #{kipisi_forward.13} parent=0 // pred_check_branch
    %166 = sbr.rel (0) target = $region41
  $region40: #{kipisi_forward.13} parent=0 // pred_region
    _
  $region41: #{kipisi_forward.13} parent=0 // pred_fallthru
    _

// kernel: kipisi_forward.12
$region0: #{kipisi_forward.12}
  #allocation0 [shape = 'u32[]', space=smem, size = 0x4, offset = 0x4, fixed_abs, tag = 'smem constant byte address 0x4 - core index']
  #allocation1 [shape = 'u32[72,128]{1,0:T(1,128)}', space=vmem, size = 0x9000, scoped, tag = 'internal scratch']
  %s0 = inlined_call_operand.vmem [shape: f32[2,1,8], index: 0, kind: input, shape index: {}]
  %s1 = inlined_call_operand.vmem [shape: bf16[16,96], index: 1, kind: input, shape index: {}]
  %s2 = inlined_call_operand.vmem [shape: bf16[16,32], index: 2, kind: output, shape index: {}]
  %s3 = sld [smem:[#allocation0]]
  $region41: #{kipisi_forward.12} parent=0
    _
  %s5 = ssub.s32 1, %s3
  %s6 = scalar_select 0, %s5, %s3
  loop: start=0, step=1, limit=4
  $region2: #{kipisi_forward.12} parent=0 // loop_pre_header
    _
  $region3: #{kipisi_forward.12} parent=0 // loop_header
    %s8 = sphi 0, %s12
    %p9 = scmp.ge.s32.totalorder %s8, 4
    %s18 = sphi 0, %s20
    %s21 = sphi 0, %s18
    %s22 = sphi 0, %s21
    %s38 = sphi 0, %s22
    %s44 = sphi 0, %s46
    %s47 = sphi 0, %s44
    %s48 = sphi 0, %s47
    %s64 = sphi 0, %s48
    %s70 = sphi 0, %s72
    %s73 = sphi 0, %s70
    %s74 = sphi 0, %s73
    %s90 = sphi 0, %s74
  $region4: #{kipisi_forward.12} parent=0 // loop_header_branch
    %11 = sbr.rel (%p9) target = $region8
  $region5: #{kipisi_forward.12} parent=0 // loop_body
    %s13 = ssub.s32 %s8, 1
    %s14 = ssub.s32 %s8, 2
    %s15 = sadd.s32 %s8, 1
    %s16 = ssub.s32 %s8, %s15
    %p17 = scmp.eq.s32.totalorder %s16, 0
    %s19 = sadd.s32 %s18, 1
    %s20 = scalar_select %p17, %s18, %s19
    %p23 = pneg %p17
    %p24 = scmp.eq.s32.totalorder %s8, 1
    %p25 = por %p23, %p24
    %p26 = scmp.ne.s32.totalorder %s18, %s21
    %p27 = scmp.eq.s32.totalorder %s8, 0
    %p28 = por %p26, %p27
    %p29 = scmp.ne.s32.totalorder %s18, %s21
    %p30 = scmp.eq.s32.totalorder %s13, 1
    %p31 = por %p29, %p30
    %p32 = scmp.ne.s32.totalorder %s21, %s22
    %p33 = scmp.eq.s32.totalorder %s13, 0
    %p34 = por %p32, %p33
    %p35 = scmp.ne.s32.totalorder %s21, %s22
    %p36 = scmp.eq.s32.totalorder %s14, 1
    %p37 = por %p35, %p36
    %p39 = scmp.ne.s32.totalorder %s22, %s38
    %p40 = scmp.eq.s32.totalorder %s14, 0
    %p41 = por %p39, %p40
    %s42 = ssub.s32 %s8, %s15
    %p43 = scmp.eq.s32.totalorder %s42, 0
    %s45 = sadd.s32 %s44, 1
    %s46 = scalar_select %p43, %s44, %s45
    %p49 = pneg %p43
    %p50 = scmp.eq.s32.totalorder %s8, 1
    %p51 = por %p49, %p50
    %p52 = scmp.ne.s32.totalorder %s44, %s47
    %p53 = scmp.eq.s32.totalorder %s8, 0
    %p54 = por %p52, %p53
    %p55 = scmp.ne.s32.totalorder %s44, %s47
    %p56 = scmp.eq.s32.totalorder %s13, 1
    %p57 = por %p55, %p56
    %p58 = scmp.ne.s32.totalorder %s47, %s48
    %p59 = scmp.eq.s32.totalorder %s13, 0
    %p60 = por %p58, %p59
    %p61 = scmp.ne.s32.totalorder %s47, %s48
    %p62 = scmp.eq.s32.totalorder %s14, 1
    %p63 = por %p61, %p62
    %p65 = scmp.ne.s32.totalorder %s48, %s64
    %p66 = scmp.eq.s32.totalorder %s14, 0
    %p67 = por %p65, %p66
    %s68 = ssub.s32 %s8, %s15
    %p69 = scmp.eq.s32.totalorder %s68, 0
    %s71 = sadd.s32 %s70, 1
    %s72 = scalar_select %p69, %s70, %s71
    %p75 = pneg %p69
    %p76 = scmp.eq.s32.totalorder %s8, 1
    %p77 = por %p75, %p76
    %p78 = scmp.ne.s32.totalorder %s70, %s73
    %p79 = scmp.eq.s32.totalorder %s8, 0
    %p80 = por %p78, %p79
    %p81 = scmp.ne.s32.totalorder %s70, %s73
    %p82 = scmp.eq.s32.totalorder %s13, 1
    %p83 = por %p81, %p82
    %p84 = scmp.ne.s32.totalorder %s73, %s74
    %p85 = scmp.eq.s32.totalorder %s13, 0
    %p86 = por %p84, %p85
    %p87 = scmp.ne.s32.totalorder %s73, %s74
    %p88 = scmp.eq.s32.totalorder %s14, 1
    %p89 = por %p87, %p88
    %p91 = scmp.ne.s32.totalorder %s74, %s90
    %p92 = scmp.eq.s32.totalorder %s14, 0
    %p93 = por %p91, %p92
    %p94 = scmp.le.s32.totalorder 1, %s8
    %p95 = scmp.lt.s32.totalorder %s8, 3
    %p96 = pnand %p94, %p95
    %p97 = pneg %p96
    // Predicated region
    $region9: #{kipisi_forward.12} parent=5 // pred_check
      _
    $region10: #{kipisi_forward.12} parent=5 // pred_check_branch
      %99 = sbr.rel (%p96) target = $region12
    $region11: #{kipisi_forward.12} parent=5 // pred_region
      %s100 = ssub.s32 %s8, 1
    $region12: #{kipisi_forward.12} parent=5 // pred_fallthru
      _
    %p101 = scmp.lt.s32.totalorder %s8, 2
    // Predicated region
    $region13: #{kipisi_forward.12} parent=5 // pred_check
      %p102 = pneg %p101
    $region14: #{kipisi_forward.12} parent=5 // pred_check_branch
      %104 = sbr.rel (%p102) target = $region16
    $region15: #{kipisi_forward.12} parent=5 // pred_region
      // Predicated region
      $region17: #{kipisi_forward.12} parent=15 // pred_check
        %p105 = pneg %p28
      $region18: #{kipisi_forward.12} parent=15 // pred_check_branch
        %107 = sbr.rel (%p105) target = $region20
      $region19: #{kipisi_forward.12} parent=15 // pred_region
        %p108 = scmp.lt.s32.totalorder %s8, 1
        %s109 = scalar_select %p108, %s8, 1
        %s110 = scalar_lea.vmem %s0, %s109
      $region20: #{kipisi_forward.12} parent=15 // pred_fallthru
        _
      // Predicated region
      $region21: #{kipisi_forward.12} parent=15 // pred_check
        %p111 = pneg %p54
      $region22: #{kipisi_forward.12} parent=15 // pred_check_branch
        %113 = sbr.rel (%p111) target = $region24
      $region23: #{kipisi_forward.12} parent=15 // pred_region
        %p114 = scmp.lt.s32.totalorder %s8, 1
        %s115 = scalar_select %p114, %s8, 1
        %s116 = smul.addr %s115, 4
        %s117 = scalar_lea.vmem %s1, %s116
      $region24: #{kipisi_forward.12} parent=15 // pred_fallthru
        _
    $region16: #{kipisi_forward.12} parent=5 // pred_fallthru
      _
    %p118 = scmp.le.s32.totalorder 1, %s8
    %p119 = scmp.lt.s32.totalorder %s8, 3
    %p120 = pnand %p118, %p119
    %p121 = pneg %p120
    // Predicated region
    $region25: #{kipisi_forward.12} parent=5 // pred_check
      _
    $region26: #{kipisi_forward.12} parent=5 // pred_check_branch
      %123 = sbr.rel (%p120) target = $region28
    $region27: #{kipisi_forward.12} parent=5 // pred_region
      %s124 = ssub.s32 %s8, 1
      %p125 = scmp.lt.s32.totalorder %s13, 1
      %s126 = scalar_select %p125, %s13, 1
      %s127 = scalar_lea.vmem %s0, %s126
      %p128 = pneg %p34
      %p129 = pneg %p31
      %p130 = scmp.lt.s32.totalorder %s13, 1
      %s131 = scalar_select %p130, %s13, 1
      %s132 = smul.addr %s131, 4
      %s133 = scalar_lea.vmem %s1, %s132
      %p134 = pneg %p60
      %p135 = pneg %p57
      %p136 = pneg %p86
      %p137 = pneg %p83
      %p138 = scmp.lt.s32.totalorder %s13, 1
      %s139 = scalar_select %p138, %s13, 1
      %s140 = smul.addr %s139, 4
      %s141 = scalar_lea.vmem %s2, %s140
      %p142 = scmp.lt.s32.totalorder %s13, 1
      %s143 = scalar_select %p142, %s13, 1
      %s144 = scalar_lea.vmem %s0, %s143
      %p145 = scmp.lt.s32.totalorder %s13, 1
      %s146 = scalar_select %p145, %s13, 1
      %s147 = smul.addr %s146, 4
      %s148 = scalar_lea.vmem %s1, %s147
      %p149 = scmp.lt.s32.totalorder %s13, 1
      %s150 = scalar_select %p149, %s13, 1
      %s151 = smul.addr %s150, 4
      %s152 = scalar_lea.vmem %s2, %s151
      %v154 = vld [vmem:[%s144] sm:$0x1]
      %v155 = vld [vmem:[%s148] sm:$0xf]
      %v157 = vperm.slane %v154, 0
      %v160 = vunpack.c.l.b16 %v155
      %v161 = vpack.c.b16 %v160, %v160
      %162 = vrot.lane.b32.xlu0 %v161, 96
      %v163 = vpop.permute.xlu0 %162
      %vm164 = vcmask 64512
      %v166 = vsel %vm164, %v155, 0
      %v169 = vsel %vm164, %v163, 0
      %171 = vmatpush.bf16.xpose.msra.mxu0 0
      %172 = vmatpush.bf16.xpose.msra.mxu0 0
      %173 = vmatpush.bf16.xpose.msra.mxu0 0
      %174 = vmatpush.bf16.xpose.msra.mxu0 0
      %175 = vmatpush.bf16.xpose.msra.mxu0 0
      %176 = vmatpush.bf16.xpose.msra.mxu0 0
      %177 = vmatpush.bf16.xpose.msra.mxu0 0
      %178 = vmatpush.bf16.xpose.msra.mxu0 %v169
      %179 = vmatmul.bf16.gmra.mxu0 %v166
      %v180 = vpop.f32.mrf.mxu0
      %v181 = vadd.f32 %v157, %v180
      %v182 = vpop.f32.mrf.mxu0
      %183 = vdwg.mxu0
      %v184 = vsel %vm164, %v181, -inf
      %185 = vmax.xlane.f32.xlu0 %v184
      %v186 = vpop.xlane.xlu0 %185
      %v187 = vsub.f32 %v181, %v186
      %v188 = vmul.f32 %v187, 1.442695
      %v189 = vpow.pop %v188
      %v190 = vsel %vm164, %v189, 0.0
      %191 = vadd.xlane.f32.xlu0 %v190
      %v192 = vpop.xlane.xlu0 %191
      %v193 = vrcp.pop %v192
      %v194 = vmul.f32 %v189, %v193
      %v195 = vpack.c.bf16 %v194, %v194
      %196 = vrot.lane.b32.xlu0 %v161, 64
      %v197 = vpop.permute.xlu0 %196
      %v199 = vsel %vm164, %v195, 0
      %vm201 = vcmask 1043456
      %v203 = vsel %vm201, %v197, 0
      %205 = vmatpush.bf16.msra.mxu0 0
      %206 = vmatpush.bf16.msra.mxu0 0
      %207 = vmatpush.bf16.msra.mxu0 0
      %208 = vmatpush.bf16.msra.mxu0 0
      %209 = vmatpush.bf16.msra.mxu0 0
      %210 = vmatpush.bf16.msra.mxu0 0
      %211 = vmatpush.bf16.msra.mxu0 0
      %212 = vmatpush.bf16.msra.mxu0 %v203
      %213 = vmatmul.bf16.gmra.mxu0 %v199
      %v214 = vpop.f32.mrf.mxu0
      %v215 = vadd.f32 0.0, %v214
      %v216 = vpop.f32.mrf.mxu0
      %217 = vdwg.mxu0
      %v218 = vpack.c.bf16 %v215, %v215
      %219 = vrot.lane.b32.xlu0 %v161, 120
      %v220 = vpop.permute.xlu0 %219
      %221 = vrot.lane.b32.xlu0 %v161, 88
      %v222 = vpop.permute.xlu0 %221
      %v224 = vsel %vm164, %v220, 0
      %v227 = vsel %vm164, %v222, 0
      %229 = vmatpush.bf16.xpose.msra.mxu0 0
      %230 = vmatpush.bf16.xpose.msra.mxu0 0
      %231 = vmatpush.bf16.xpose.msra.mxu0 0
      %232 = vmatpush.bf16.xpose.msra.mxu0 0
      %233 = vmatpush.bf16.xpose.msra.mxu0 0
      %234 = vmatpush.bf16.xpose.msra.mxu0 0
      %235 = vmatpush.bf16.xpose.msra.mxu0 0
      %236 = vmatpush.bf16.xpose.msra.mxu0 %v227
      %237 = vmatmul.bf16.gmra.mxu0 %v224
      %v238 = vpop.f32.mrf.mxu0
      %v239 = vadd.f32 %v157, %v238
      %v240 = vpop.f32.mrf.mxu0
      %241 = vdwg.mxu0
      %v242 = vsel %vm164, %v239, -inf
      %243 = vmax.xlane.f32.xlu0 %v242
      %v244 = vpop.xlane.xlu0 %243
      %v245 = vsub.f32 %v239, %v244
      %v246 = vmul.f32 %v245, 1.442695
      %v247 = vpow.pop %v246
      %v248 = vsel %vm164, %v247, 0.0
      %249 = vadd.xlane.f32.xlu0 %v248
      %v250 = vpop.xlane.xlu0 %249
      %v251 = vrcp.pop %v250
      %v252 = vmul.f32 %v247, %v251
      %v253 = vpack.c.bf16 %v252, %v252
      %254 = vrot.lane.b32.xlu0 %v161, 56
      %v255 = vpop.permute.xlu0 %254
      %v257 = vsel %vm164, %v253, 0
      %v260 = vsel %vm201, %v255, 0
      %262 = vmatpush.bf16.msra.mxu0 0
      %263 = vmatpush.bf16.msra.mxu0 0
      %264 = vmatpush.bf16.msra.mxu0 0
      %265 = vmatpush.bf16.msra.mxu0 0
      %266 = vmatpush.bf16.msra.mxu0 0
      %267 = vmatpush.bf16.msra.mxu0 0
      %268 = vmatpush.bf16.msra.mxu0 0
      %269 = vmatpush.bf16.msra.mxu0 %v260
      %270 = vmatmul.bf16.gmra.mxu0 %v257
      %v271 = vpop.f32.mrf.mxu0
      %v272 = vadd.f32 0.0, %v271
      %v273 = vpop.f32.mrf.mxu0
      %274 = vdwg.mxu0
      %v275 = vpack.c.bf16 %v272, %v272
      %276 = vrot.lane.b32.xlu0 %v161, 112
      %v277 = vpop.permute.xlu0 %276
      %278 = vrot.lane.b32.xlu0 %v161, 80
      %v279 = vpop.permute.xlu0 %278
      %v281 = vsel %vm164, %v277, 0
      %v284 = vsel %vm164, %v279, 0
      %286 = vmatpush.bf16.xpose.msra.mxu0 0
      %287 = vmatpush.bf16.xpose.msra.mxu0 0
      %288 = vmatpush.bf16.xpose.msra.mxu0 0
      %289 = vmatpush.bf16.xpose.msra.mxu0 0
      %290 = vmatpush.bf16.xpose.msra.mxu0 0
      %291 = vmatpush.bf16.xpose.msra.mxu0 0
      %292 = vmatpush.bf16.xpose.msra.mxu0 0
      %293 = vmatpush.bf16.xpose.msra.mxu0 %v284
      %294 = vmatmul.bf16.gmra.mxu0 %v281
      %v295 = vpop.f32.mrf.mxu0
      %v296 = vadd.f32 %v157, %v295
      %v297 = vpop.f32.mrf.mxu0
      %298 = vdwg.mxu0
      %v299 = vsel %vm164, %v296, -inf
      %300 = vmax.xlane.f32.xlu0 %v299
      %v301 = vpop.xlane.xlu0 %300
      %v302 = vsub.f32 %v296, %v301
      %v303 = vmul.f32 %v302, 1.442695
      %v304 = vpow.pop %v303
      %v305 = vsel %vm164, %v304, 0.0
      %306 = vadd.xlane.f32.xlu0 %v305
      %v307 = vpop.xlane.xlu0 %306
      %v308 = vrcp.pop %v307
      %v309 = vmul.f32 %v304, %v308
      %v310 = vpack.c.bf16 %v309, %v309
      %311 = vrot.lane.b32.xlu0 %v161, 48
      %v312 = vpop.permute.xlu0 %311
      %v314 = vsel %vm164, %v310, 0
      %v317 = vsel %vm201, %v312, 0
      %319 = vmatpush.bf16.msra.mxu0 0
      %320 = vmatpush.bf16.msra.mxu0 0
      %321 = vmatpush.bf16.msra.mxu0 0
      %322 = vmatpush.bf16.msra.mxu0 0
      %323 = vmatpush.bf16.msra.mxu0 0
      %324 = vmatpush.bf16.msra.mxu0 0
      %325 = vmatpush.bf16.msra.mxu0 0
      %326 = vmatpush.bf16.msra.mxu0 %v317
      %327 = vmatmul.bf16.gmra.mxu0 %v314
      %v328 = vpop.f32.mrf.mxu0
      %v329 = vadd.f32 0.0, %v328
      %v330 = vpop.f32.mrf.mxu0
      %331 = vdwg.mxu0
      %v332 = vpack.c.bf16 %v329, %v329
      %333 = vrot.lane.b32.xlu0 %v161, 104
      %v334 = vpop.permute.xlu0 %333
      %335 = vrot.lane.b32.xlu0 %v161, 72
      %v336 = vpop.permute.xlu0 %335
      %v338 = vsel %vm164, %v334, 0
      %v341 = vsel %vm164, %v336, 0
      %343 = vmatpush.bf16.xpose.msra.mxu0 0
      %344 = vmatpush.bf16.xpose.msra.mxu0 0
      %345 = vmatpush.bf16.xpose.msra.mxu0 0
      %346 = vmatpush.bf16.xpose.msra.mxu0 0
      %347 = vmatpush.bf16.xpose.msra.mxu0 0
      %348 = vmatpush.bf16.xpose.msra.mxu0 0
      %349 = vmatpush.bf16.xpose.msra.mxu0 0
      %350 = vmatpush.bf16.xpose.msra.mxu0 %v341
      %351 = vmatmul.bf16.gmra.mxu0 %v338
      %v352 = vpop.f32.mrf.mxu0
      %v353 = vadd.f32 %v157, %v352
      %v354 = vpop.f32.mrf.mxu0
      %355 = vdwg.mxu0
      %v356 = vsel %vm164, %v353, -inf
      %357 = vmax.xlane.f32.xlu0 %v356
      %v358 = vpop.xlane.xlu0 %357
      %v359 = vsub.f32 %v353, %v358
      %v360 = vmul.f32 %v359, 1.442695
      %v361 = vpow.pop %v360
      %v362 = vsel %vm164, %v361, 0.0
      %363 = vadd.xlane.f32.xlu0 %v362
      %v364 = vpop.xlane.xlu0 %363
      %v365 = vrcp.pop %v364
      %v366 = vmul.f32 %v361, %v365
      %v367 = vpack.c.bf16 %v366, %v366
      %368 = vrot.lane.b32.xlu0 %v161, 40
      %v369 = vpop.permute.xlu0 %368
      %v371 = vsel %vm164, %v367, 0
      %v374 = vsel %vm201, %v369, 0
      %376 = vmatpush.bf16.msra.mxu0 0
      %377 = vmatpush.bf16.msra.mxu0 0
      %378 = vmatpush.bf16.msra.mxu0 0
      %379 = vmatpush.bf16.msra.mxu0 0
      %380 = vmatpush.bf16.msra.mxu0 0
      %381 = vmatpush.bf16.msra.mxu0 0
      %382 = vmatpush.bf16.msra.mxu0 0
      %383 = vmatpush.bf16.msra.mxu0 %v374
      %384 = vmatmul.bf16.gmra.mxu0 %v371
      %v385 = vpop.f32.mrf.mxu0
      %v386 = vadd.f32 0.0, %v385
      %v387 = vpop.f32.mrf.mxu0
      %388 = vdwg.mxu0
      %v389 = vpack.c.bf16 %v386, %v386
      %v391 = vunpack.c.l.b16 %v275
      %v392 = vpack.c.b16 %v391, %v391
      %393 = vrot.lane.b32.xlu0 %v392, 8
      %v394 = vpop.permute.xlu0 %393
      %v396 = vunpack.c.l.b16 %v332
      %v397 = vpack.c.b16 %v396, %v396
      %398 = vrot.lane.b32.xlu0 %v397, 16
      %v399 = vpop.permute.xlu0 %398
      %v401 = vunpack.c.l.b16 %v389
      %v402 = vpack.c.b16 %v401, %v401
      %403 = vrot.lane.b32.xlu0 %v402, 24
      %v404 = vpop.permute.xlu0 %403
      %v407 = vsel %vm164, %v218, %v394
      %vm408 = vcmask 130048
      %v410 = vsel %vm408, %v407, %v399
      %vm411 = vcmask 195584
      %v413 = vsel %vm411, %v410, %v404
      %vm415 = vcmask 257024
      %416 = vst.msk [vmem:[%s152] sm:$0xf] %vm415, %v413
      %p417 = scmp.lt.s32.totalorder %s13, 1
      %s418 = scalar_select %p417, %s13, 1
      %s419 = smul.addr %s418, 4
      %s420 = scalar_lea.vmem %s2, %s419
      // Predicated region
      $region29: #{kipisi_forward.12} parent=27 // pred_check
        %p421 = pneg %p83
      $region30: #{kipisi_forward.12} parent=27 // pred_check_branch
        %423 = sbr.rel (%p421) target = $region32
      $region31: #{kipisi_forward.12} parent=27 // pred_region
        _
      $region32: #{kipisi_forward.12} parent=27 // pred_fallthru
        _
    $region28: #{kipisi_forward.12} parent=5 // pred_fallthru
      _
    %p424 = scmp.le.s32.totalorder 2, %s8
    // Predicated region
    $region33: #{kipisi_forward.12} parent=5 // pred_check
      %p425 = pneg %p424
    $region34: #{kipisi_forward.12} parent=5 // pred_check_branch
      %427 = sbr.rel (%p425) target = $region36
    $region35: #{kipisi_forward.12} parent=5 // pred_region
      %s428 = ssub.s32 %s8, 2
      // Predicated region
      $region37: #{kipisi_forward.12} parent=35 // pred_check
        %p429 = pneg %p89
      $region38: #{kipisi_forward.12} parent=35 // pred_check_branch
        %431 = sbr.rel (%p429) target = $region40
      $region39: #{kipisi_forward.12} parent=35 // pred_region
        %p432 = scmp.lt.s32.totalorder %s14, 1
        %s433 = scalar_select %p432, %s14, 1
        %s434 = smul.addr %s433, 4
        %s435 = scalar_lea.vmem %s2, %s434
      $region40: #{kipisi_forward.12} parent=35 // pred_fallthru
        _
    $region36: #{kipisi_forward.12} parent=5 // pred_fallthru
      _
  $region6: #{kipisi_forward.12} parent=0 // loop_footer
    %s12 = sadd.s32 1, %s8
  $region7: #{kipisi_forward.12} parent=0 // loop_footer_branch
    %7 = sbr.rel target = $region3
  $region8: #{kipisi_forward.12} parent=0 // loop_exit
    _

// kernel: kipisi_forward.15
$region0: #{kipisi_forward.15}
  #allocation0 [shape = 'u32[]', space=smem, size = 0x4, offset = 0x4, fixed_abs, tag = 'smem constant byte address 0x4 - core index']
  #allocation1 [shape = 'u32[72,128]{1,0:T(1,128)}', space=vmem, size = 0x9000, scoped, tag = 'internal scratch']
  #allocation2 [shape = 'f32[16,32]{1,0:T(8,128)}', space=vmem, size = 0x2000, scoped, tag = 'scratch operand']
  %s0 = inlined_call_operand.vmem [shape: bf16[16,64], index: 0, kind: input, shape index: {}]
  %s1 = inlined_call_operand.vmem [shape: bf16[64,32], index: 1, kind: input, shape index: {}]
  %s2 = inlined_call_operand.vmem [shape: f32[1,32], index: 2, kind: input, shape index: {}]
  %s3 = inlined_call_operand.vmem [shape: bf16[16,32], index: 3, kind: input, shape index: {}]
  %s4 = inlined_call_operand.vmem [shape: f32[1,32], index: 4, kind: input, shape index: {}]
  %s5 = inlined_call_operand.vmem [shape: f32[1,32], index: 5, kind: input, shape index: {}]
  %s6 = inlined_call_operand.vmem [shape: bf16[16,32], index: 6, kind: output, shape index: {}]
  %s7 = sld [smem:[#allocation0]]
  $region42: #{kipisi_forward.15} parent=0
    _
  %s9 = ssub.s32 1, %s7
  %s10 = scalar_select 0, %s9, %s7
  // Predicated region
  $region2: #{kipisi_forward.15} parent=0 // pred_check
    _
  $region3: #{kipisi_forward.15} parent=0 // pred_check_branch
    %12 = sbr.rel (0) target = $region5
  $region4: #{kipisi_forward.15} parent=0 // pred_region
    _
  $region5: #{kipisi_forward.15} parent=0 // pred_fallthru
    _
  // Predicated region
  $region6: #{kipisi_forward.15} parent=0 // pred_check
    _
  $region7: #{kipisi_forward.15} parent=0 // pred_check_branch
    %14 = sbr.rel (0) target = $region9
  $region8: #{kipisi_forward.15} parent=0 // pred_region
    _
  $region9: #{kipisi_forward.15} parent=0 // pred_fallthru
    _
  // Predicated region
  $region10: #{kipisi_forward.15} parent=0 // pred_check
    _
  $region11: #{kipisi_forward.15} parent=0 // pred_check_branch
    %16 = sbr.rel (0) target = $region13
  $region12: #{kipisi_forward.15} parent=0 // pred_region
    _
  $region13: #{kipisi_forward.15} parent=0 // pred_fallthru
    _
  // Predicated region
  $region14: #{kipisi_forward.15} parent=0 // pred_check
    _
  $region15: #{kipisi_forward.15} parent=0 // pred_check_branch
    %18 = sbr.rel (0) target = $region17
  $region16: #{kipisi_forward.15} parent=0 // pred_region
    _
  $region17: #{kipisi_forward.15} parent=0 // pred_fallthru
    _
  // Predicated region
  $region18: #{kipisi_forward.15} parent=0 // pred_check
    _
  $region19: #{kipisi_forward.15} parent=0 // pred_check_branch
    %20 = sbr.rel (0) target = $region21
  $region20: #{kipisi_forward.15} parent=0 // pred_region
    _
  $region21: #{kipisi_forward.15} parent=0 // pred_fallthru
    _
  // Predicated region
  $region22: #{kipisi_forward.15} parent=0 // pred_check
    _
  $region23: #{kipisi_forward.15} parent=0 // pred_check_branch
    %22 = sbr.rel (0) target = $region25
  $region24: #{kipisi_forward.15} parent=0 // pred_region
    _
  $region25: #{kipisi_forward.15} parent=0 // pred_fallthru
    _
  %p24 = scmp.eq.s32.totalorder 0, 0
  // Predicated region
  $region26: #{kipisi_forward.15} parent=0 // pred_check
    %p25 = pneg %p24
  $region27: #{kipisi_forward.15} parent=0 // pred_check_branch
    %27 = sbr.rel (%p25) target = $region29
  $region28: #{kipisi_forward.15} parent=0 // pred_region
    %vm28 = vcmask 261120
    %29 = vst.msk [vmem:[#allocation2] sm:$0xff] %vm28, 0.0
    %30 = vst.msk [vmem:[#allocation2 + $0x8] sm:$0xff] %vm28, 0.0
  $region29: #{kipisi_forward.15} parent=0 // pred_fallthru
    _
  %v31 = vld [vmem:[#allocation2] sm:$0xff]
  %v32 = vld [vmem:[#allocation2 + $0x8] sm:$0xff]
  %v33 = vld [vmem:[%s0] sm:$0xf]
  %v34 = vld [vmem:[%s0 + $0x4] sm:$0xf]
  %v35 = vld [vmem:[%s1] sm:$0xf]
  %v36 = vld [vmem:[%s1 + $0x4] sm:$0xf]
  %v37 = vld [vmem:[%s1 + $0x8] sm:$0xf]
  %v38 = vld [vmem:[%s1 + $0xc] sm:$0xf]
  %v39 = vld [vmem:[%s1 + $0x10] sm:$0xf]
  %v40 = vld [vmem:[%s1 + $0x14] sm:$0xf]
  %v41 = vld [vmem:[%s1 + $0x18] sm:$0xf]
  %v42 = vld [vmem:[%s1 + $0x1c] sm:$0xf]
  %v45 = vunpack.c.l.b16 %v33
  %v46 = vunpack.c.l.b16 %v34
  %v47 = vpack.c.b16 %v46, %v45
  %v56 = vunpack.c.l.b16 %v35
  %v57 = vunpack.c.l.b16 %v36
  %v58 = vunpack.c.l.b16 %v37
  %v59 = vunpack.c.l.b16 %v38
  %v60 = vunpack.c.l.b16 %v39
  %v61 = vunpack.c.l.b16 %v40
  %v62 = vunpack.c.l.b16 %v41
  %v63 = vunpack.c.l.b16 %v42
  %v64 = vpack.c.b16 %v57, %v56
  %v65 = vpack.c.b16 %v59, %v58
  %v66 = vpack.c.b16 %v61, %v60
  %v67 = vpack.c.b16 %v63, %v62
  %vm72 = vcmask 523264
  %v74 = vsel %vm72, %v47, 0
  %76 = vmatpush.bf16.msra.mxu0 0
  %77 = vmatpush.bf16.msra.mxu0 0
  %78 = vmatpush.bf16.msra.mxu0 0
  %79 = vmatpush.bf16.msra.mxu0 0
  %80 = vmatpush.bf16.msra.mxu0 %v67
  %81 = vmatpush.bf16.msra.mxu0 %v66
  %82 = vmatpush.bf16.msra.mxu0 %v65
  %83 = vmatpush.bf16.msra.mxu0 %v64
  %84 = vmatmul.bf16.gmra.mxu0 %v74
  %v85 = vpop.f32.mrf.mxu0
  %v86 = vadd.f32 0.0, %v85
  %v87 = vpop.f32.mrf.mxu0
  %v88 = vadd.f32 0.0, %v87
  %89 = vdwg.mxu0
  %v90 = vadd.f32 %v31, %v86
  %v91 = vadd.f32 %v32, %v88
  %vm92 = vcmask 261120
  %93 = vst.msk [vmem:[#allocation2] sm:$0xff] %vm92, %v90
  %94 = vst.msk [vmem:[#allocation2 + $0x8] sm:$0xff] %vm92, %v91
  // Predicated region
  $region30: #{kipisi_forward.15} parent=0 // pred_check
    %p95 = pneg %p24
  $region31: #{kipisi_forward.15} parent=0 // pred_check_branch
    %97 = sbr.rel (%p95) target = $region33
  $region32: #{kipisi_forward.15} parent=0 // pred_region
    %v98 = vld [vmem:[#allocation2] sm:$0xff]
    %v99 = vld [vmem:[#allocation2 + $0x8] sm:$0xff]
    %v100 = vld [vmem:[%s2] sm:$0x1]
    %v102 = vperm.slane %v100, 0
    %v104 = vadd.f32 %v98, %v102
    %v105 = vadd.f32 %v99, %v102
    %v106 = vld [vmem:[%s3] sm:$0xf]
    %v107 = vld [vmem:[%s3 + $0x4] sm:$0xf]
    %v108 = vunpack.c.l.bf16 %v106
    %v109 = vunpack.c.l.bf16 %v107
    %v110 = vadd.f32 %v104, %v108
    %v111 = vadd.f32 %v105, %v109
    %v112 = vsel %vm92, %v110, 0.0
    %113 = vadd.xlane.f32.xlu0 %v112
    %v114 = vpop.xlane.xlu0 %113
    %v115 = vsel %vm92, %v111, 0.0
    %116 = vadd.xlane.f32.xlu0 %v115
    %v117 = vpop.xlane.xlu0 %116
    %v118 = vrcp.pop 32.0
    %v119 = vmul.f32 32.0, %v118
    %v120 = vsub.f32 1.0, %v119
    %v121 = vmul.f32 %v118, %v120
    %v122 = vadd.f32 %v118, %v121
    %vm123 = vweird.f32 %v118
    %v124 = vsel %vm123, %v118, %v122
    %v125 = vmul.f32 %v114, %v124
    %v126 = vmul.f32 %v117, %v124
    %v127 = vsub.f32 %v110, %v125
    %v128 = vsub.f32 %v111, %v126
    %v129 = vmul.f32 %v127, %v127
    %v130 = vmul.f32 %v128, %v128
    %v131 = vsel %vm92, %v129, 0.0
    %132 = vadd.xlane.f32.xlu0 %v131
    %v133 = vpop.xlane.xlu0 %132
    %v134 = vsel %vm92, %v130, 0.0
    %135 = vadd.xlane.f32.xlu0 %v134
    %v136 = vpop.xlane.xlu0 %135
    %v137 = vmul.f32 %v133, %v124
    %v138 = vmul.f32 %v136, %v124
    %v139 = vadd.f32 %v137, 1e-05
    %v140 = vadd.f32 %v138, 1e-05
    %v141 = vrsqrt.pop %v139
    %v142 = vmul.f32 %v141, %v139
    %v143 = vmul.f32 %v142, %v141
    %v144 = vmul.f32 0.5, %v143
    %v145 = vsub.f32 1.5, %v144
    %v146 = vmul.f32 %v141, %v145
    %vm147 = vweird.f32 %v139
    %vm148 = vweird.f32 %v141
    %vm149 = vmor %vm147, %vm148
    %v150 = vsel %vm149, %v141, %v146
    %v151 = vrsqrt.pop %v140
    %v152 = vmul.f32 %v151, %v140
    %v153 = vmul.f32 %v152, %v151
    %v154 = vmul.f32 0.5, %v153
    %v155 = vsub.f32 1.5, %v154
    %v156 = vmul.f32 %v151, %v155
    %vm157 = vweird.f32 %v140
    %vm158 = vweird.f32 %v151
    %vm159 = vmor %vm157, %vm158
    %v160 = vsel %vm159, %v151, %v156
    %v161 = vmul.f32 %v127, %v150
    %v162 = vmul.f32 %v128, %v160
    %v163 = vld [vmem:[%s4] sm:$0x1]
    %v165 = vperm.slane %v163, 0
    %v167 = vmul.f32 %v161, %v165
    %v168 = vmul.f32 %v162, %v165
    %v169 = vld [vmem:[%s5] sm:$0x1]
    %v171 = vperm.slane %v169, 0
    %v173 = vadd.f32 %v167, %v171
    %v174 = vadd.f32 %v168, %v171
    %v175 = vpack.c.bf16 %v173, %v173
    %v176 = vpack.c.bf16 %v174, %v174
    %vm177 = vcmask 257024
    %178 = vst.msk [vmem:[%s6] sm:$0xf] %vm177, %v175
    %179 = vst.msk [vmem:[%s6 + $0x4] sm:$0xf] %vm177, %v176
  $region33: #{kipisi_forward.15} parent=0 // pred_fallthru
    _
  // Predicated region
  $region34: #{kipisi_forward.15} parent=0 // pred_check
    _
  $region35: #{kipisi_forward.15} parent=0 // pred_check_branch
    %181 = sbr.rel (0) target = $region37
  $region36: #{kipisi_forward.15} parent=0 // pred_region
    _
  $region37: #{kipisi_forward.15} parent=0 // pred_fallthru
    _
  // Predicated region
  $region38: #{kipisi_forward.15} parent=0 // pred_check
    _
  $region39: #{kipisi_forward.15} parent=0 // pred_check_branch
    %183 = sbr.rel (0) target = $region41
  $region40: #{kipisi_forward.15} parent=0 // pred_region
    _
  $region41: #{kipisi_forward.15} parent=0 // pred_fallthru
    _

// kernel: kipisi_forward.21
$region0: #{kipisi_forward.21}
  #allocation0 [shape = 'u32[]', space=smem, size = 0x4, offset = 0x4, fixed_abs, tag = 'smem constant byte address 0x4 - core index']
  #allocation1 [shape = 'u32[72,128]{1,0:T(1,128)}', space=vmem, size = 0x9000, scoped, tag = 'internal scratch']
  #allocation2 [shape = 'f32[16,128]{1,0:T(8,128)}', space=vmem, size = 0x2000, scoped, tag = 'scratch operand']
  %s0 = inlined_call_operand.vmem [shape: bf16[16,32], index: 0, kind: input, shape index: {}]
  %s1 = inlined_call_operand.vmem [shape: bf16[32,128], index: 1, kind: input, shape index: {}]
  %s2 = inlined_call_operand.vmem [shape: f32[1,128], index: 2, kind: input, shape index: {}]
  %s3 = inlined_call_operand.vmem [shape: f32[16,128], index: 3, kind: output, shape index: {}]
  %s4 = sld [smem:[#allocation0]]
  $region30: #{kipisi_forward.21} parent=0
    _
  %s6 = ssub.s32 1, %s4
  %s7 = scalar_select 0, %s6, %s4
  // Predicated region
  $region2: #{kipisi_forward.21} parent=0 // pred_check
    _
  $region3: #{kipisi_forward.21} parent=0 // pred_check_branch
    %9 = sbr.rel (0) target = $region5
  $region4: #{kipisi_forward.21} parent=0 // pred_region
    _
  $region5: #{kipisi_forward.21} parent=0 // pred_fallthru
    _
  // Predicated region
  $region6: #{kipisi_forward.21} parent=0 // pred_check
    _
  $region7: #{kipisi_forward.21} parent=0 // pred_check_branch
    %11 = sbr.rel (0) target = $region9
  $region8: #{kipisi_forward.21} parent=0 // pred_region
    _
  $region9: #{kipisi_forward.21} parent=0 // pred_fallthru
    _
  // Predicated region
  $region10: #{kipisi_forward.21} parent=0 // pred_check
    _
  $region11: #{kipisi_forward.21} parent=0 // pred_check_branch
    %13 = sbr.rel (0) target = $region13
  $region12: #{kipisi_forward.21} parent=0 // pred_region
    _
  $region13: #{kipisi_forward.21} parent=0 // pred_fallthru
    _
  %p15 = scmp.eq.s32.totalorder 0, 0
  // Predicated region
  $region14: #{kipisi_forward.21} parent=0 // pred_check
    %p16 = pneg %p15
  $region15: #{kipisi_forward.21} parent=0 // pred_check_branch
    %18 = sbr.rel (%p16) target = $region17
  $region16: #{kipisi_forward.21} parent=0 // pred_region
    %19 = vst [vmem:[#allocation2] sm:$0xff] 0.0
    %20 = vst [vmem:[#allocation2 + $0x8] sm:$0xff] 0.0
  $region17: #{kipisi_forward.21} parent=0 // pred_fallthru
    _
  %v21 = vld [vmem:[#allocation2] sm:$0xff]
  %v22 = vld [vmem:[#allocation2 + $0x8] sm:$0xff]
  %v23 = vld [vmem:[%s0] sm:$0xf]
  %v24 = vld [vmem:[%s0 + $0x4] sm:$0xf]
  %v25 = vld [vmem:[%s1] sm:$0xf]
  %v26 = vld [vmem:[%s1 + $0x4] sm:$0xf]
  %v27 = vld [vmem:[%s1 + $0x8] sm:$0xf]
  %v28 = vld [vmem:[%s1 + $0xc] sm:$0xf]
  %v31 = vunpack.c.l.b16 %v23
  %v32 = vunpack.c.l.b16 %v24
  %v33 = vpack.c.b16 %v32, %v31
  %v38 = vunpack.c.l.b16 %v25
  %v39 = vunpack.c.l.b16 %v26
  %v40 = vunpack.c.l.b16 %v27
  %v41 = vunpack.c.l.b16 %v28
  %v42 = vpack.c.b16 %v39, %v38
  %v43 = vpack.c.b16 %v41, %v40
  %vm46 = vcmask 261120
  %v48 = vsel %vm46, %v33, 0
  %50 = vmatpush.bf16.msra.mxu0 0
  %51 = vmatpush.bf16.msra.mxu0 0
  %52 = vmatpush.bf16.msra.mxu0 0
  %53 = vmatpush.bf16.msra.mxu0 0
  %54 = vmatpush.bf16.msra.mxu0 0
  %55 = vmatpush.bf16.msra.mxu0 0
  %56 = vmatpush.bf16.msra.mxu0 %v43
  %57 = vmatpush.bf16.msra.mxu0 %v42
  %58 = vmatmul.bf16.gmra.mxu0 %v48
  %v59 = vpop.f32.mrf.mxu0
  %v60 = vadd.f32 0.0, %v59
  %v61 = vpop.f32.mrf.mxu0
  %v62 = vadd.f32 0.0, %v61
  %63 = vdwg.mxu0
  %v64 = vadd.f32 %v21, %v60
  %v65 = vadd.f32 %v22, %v62
  %66 = vst [vmem:[#allocation2] sm:$0xff] %v64
  %67 = vst [vmem:[#allocation2 + $0x8] sm:$0xff] %v65
  // Predicated region
  $region18: #{kipisi_forward.21} parent=0 // pred_check
    %p68 = pneg %p15
  $region19: #{kipisi_forward.21} parent=0 // pred_check_branch
    %70 = sbr.rel (%p68) target = $region21
  $region20: #{kipisi_forward.21} parent=0 // pred_region
    %v71 = vld [vmem:[#allocation2] sm:$0xff]
    %v72 = vld [vmem:[#allocation2 + $0x8] sm:$0xff]
    %v73 = vld [vmem:[%s2] sm:$0x1]
    %v75 = vperm.slane %v73, 0
    %v77 = vadd.f32 %v71, %v75
    %v78 = vadd.f32 %v72, %v75
    %79 = vst [vmem:[%s3] sm:$0xff] %v77
    %80 = vst [vmem:[%s3 + $0x8] sm:$0xff] %v78
  $region21: #{kipisi_forward.21} parent=0 // pred_fallthru
    _
  // Predicated region
  $region22: #{kipisi_forward.21} parent=0 // pred_check
    _
  $region23: #{kipisi_forward.21} parent=0 // pred_check_branch
    %82 = sbr.rel (0) target = $region25
  $region24: #{kipisi_forward.21} parent=0 // pred_region
    _
  $region25: #{kipisi_forward.21} parent=0 // pred_fallthru
    _
  // Predicated region
  $region26: #{kipisi_forward.21} parent=0 // pred_check
    _
  $region27: #{kipisi_forward.21} parent=0 // pred_check_branch
    %84 = sbr.rel (0) target = $region29
  $region28: #{kipisi_forward.21} parent=0 // pred_region
    _
  $region29: #{kipisi_forward.21} parent=0 // pred_fallthru
    _

</llo_original>
